<compile_context>
chip_gen: v5e
topology: v5e:2x2
jax: 0.10.0
libtpu: 0.0.40
codegen_flags: <defaults>
</compile_context>

<pallas_src>
import functools

import numpy as np
import jax
import jax.numpy as jnp
from jax import lax
from jax.experimental import pallas as pl
from jax.experimental.pallas import tpu as pltpu


MARGIN = 128  # lane-aligned zero margin on each side of the packed image strip


# ----------------------------------------------------------------------------
# Fused kernel: both conv+BN+ReLU stages for NB batch images per grid step.
# ----------------------------------------------------------------------------
def _conv_block_kernel(x_ref, masks_ref, w1_ref, b1_ref, w2_ref, b2_ref,
                       o_ref, ext1_ref, slab1_ref, ext2_ref, slab2_ref, *, W):
    # x_ref:     (NB, Cin_p, H*W)   channel-padded, flattened NCHW input block
    # masks_ref: (9, NB*H*W)        per-tap padding masks, tiled per image
    # w1_ref:    (Cout_p, 9*Cin_p)  BN-scale-folded conv1 weights (tap-major K)
    # b1_ref:    (Cout_p, 1)        folded BN1 bias (f32)
    # w2_ref:    (Cout_p, 9*Cout_p) BN-scale-folded conv2 weights
    # b2_ref:    (Cout_p, 1)        folded BN2 bias (f32)
    # o_ref:     (NB, Cout_p, H*W)
    # ext*_ref:  (C_p, NB*H*W + 2*MARGIN)  image strip with zero lane margins
    # slab*_ref: (9*C_p, NB*H*W)    im2col slab (compute dtype), one matmul/stage
    NB, Cin_p, HW = x_ref.shape
    Cout_p = o_ref.shape[1]
    NBHW = NB * HW
    M = MARGIN

    # One-time init: only the lane margins ever need zeros (the middle region
    # is fully rewritten every grid step and scratch persists across steps).
    @pl.when(pl.program_id(0) == 0)
    def _init():
        for ext in (ext1_ref, ext2_ref):
            c = ext.shape[0]
            ext[:, pl.ds(0, M)] = jnp.zeros((c, M), ext.dtype)
            ext[:, pl.ds(M + NBHW, M)] = jnp.zeros((c, M), ext.dtype)

    def im2col_matmul(ext_ref, slab_ref, w_ref, b_ref, c):
        # im2col: one statically lane-shifted, padding-masked copy of the image
        # strip per tap, stacked along sublanes -> (9*c, NB*HW) slab, then a
        # single K = 9*c MXU matmul with the folded weights.
        for kh in range(3):
            for kw in range(3):
                t = kh * 3 + kw
                d = (kh - 1) * W + (kw - 1)            # flattened tap offset
                shifted = ext_ref[:, pl.ds(M + d, NBHW)]     # (c, NB*HW) f32
                if NB == 1 and kw == 1:
                    # Centre-column taps only over-read in the H direction and
                    # the zero lane margins already cover that (single image).
                    tap = shifted
                else:
                    tap = shifted * masks_ref[pl.ds(t, 1), :]
                slab_ref[pl.ds(t * c, c), :] = tap.astype(slab_ref.dtype)
        y = jnp.dot(w_ref[...], slab_ref[...],
                    preferred_element_type=jnp.float32)      # (Cout_p, NB*HW)
        # Folded-BN bias + ReLU (kept in f32 for the v5e VPU path).
        return jnp.maximum(y + b_ref[...], 0.0)

    # ---- Stage 1: Conv3x3 (BN1 scale folded into w1) + bias + ReLU --------
    # Per-image stores keep every lane offset a multiple of 128 (MARGIN and HW).
    for b in range(NB):
        ext1_ref[:, pl.ds(M + b * HW, HW)] = x_ref[b].astype(jnp.float32)
    y1 = im2col_matmul(ext1_ref, slab1_ref, w1_ref, b1_ref, Cin_p)

    # ---- Stage 2: consumes y1 straight from VMEM (no HBM round trip) ------
    ext2_ref[:, pl.ds(M, NBHW)] = y1
    y2 = im2col_matmul(ext2_ref, slab2_ref, w2_ref, b2_ref, Cout_p)

    for b in range(NB):
        o_ref[b] = y2[:, b * HW:(b + 1) * HW].astype(o_ref.dtype)


# ----------------------------------------------------------------------------
# Wrapper-side parameter folding / mask construction.
# ----------------------------------------------------------------------------
def fold_bn(gamma, beta, running_mean, running_var, eps=1e-5):
    """Fold eval-mode BatchNorm2d into a per-channel scale/bias."""
    scale = gamma / jnp.sqrt(running_var + eps)
    bias = beta - running_mean * scale
    return scale, bias


def _fold_weight(w_oihw, scale, cout_p, cin_p, dtype):
    """(Cout, Cin, 3, 3) -> BN-scaled, channel-padded (Cout_p, 9*Cin_p)."""
    cout, cin = w_oihw.shape[0], w_oihw.shape[1]
    w = w_oihw * scale[:, None, None, None]
    w = jnp.pad(w, ((0, cout_p - cout), (0, cin_p - cin), (0, 0), (0, 0)))
    # K ordered (kh, kw, cin) to match the im2col slab's tap-major layout.
    return jnp.transpose(w, (0, 2, 3, 1)).reshape(cout_p, 9 * cin_p).astype(dtype)


def _tap_masks(H, W, nb):
    """masks[t, b*HW + h*W + w] = 1 iff tap t reads inside image b at (h, w)."""
    m = np.zeros((9, H, W), dtype=np.float32)
    for kh in range(3):
        for kw in range(3):
            dh, dw = kh - 1, kw - 1
            m[kh * 3 + kw,
              max(0, -dh):min(H, H - dh),
              max(0, -dw):min(W, W - dw)] = 1.0
    m = m.reshape(9, H * W)
    return jnp.asarray(np.tile(m, (1, nb)))          # (9, NB*H*W)


def conv_block_forward(x_nchw, params, *, compute_dtype=jnp.float32,
                       images_per_block=None):
    """Full conv_block forward (eval-mode BN). Input/output in NCHW.

    compute_dtype: dtype of the MXU operands (weights + im2col slab).  Use
      jnp.bfloat16 on v6e/v7x for the fast MXU path; accumulation stays f32.
    images_per_block: images per grid step (default: whole batch in one step).
      On v7x set N // 2 so the two TensorCores split the "parallel" grid.
    """
    N, Cin, H, W = x_nchw.shape
    Cout = params["w1"].shape[0]
    HW = H * W

    NB = N if images_per_block is None else images_per_block
    assert N % NB == 0, "batch must be divisible by images_per_block"

    # Channel padding so every im2col tap block starts on a full (packed) vreg
    # sublane boundary: 8 rows for f32 operands, 16 for bf16.
    packing = 4 // np.dtype(compute_dtype).itemsize
    align = 8 * packing
    Cin_p = ((Cin + align - 1) // align) * align
    Cout_p = ((Cout + align - 1) // align) * align

    s1, b1 = fold_bn(params["bn1_gamma"], params["bn1_beta"],
                     params["bn1_mean"], params["bn1_var"])
    s2, b2 = fold_bn(params["bn2_gamma"], params["bn2_beta"],
                     params["bn2_mean"], params["bn2_var"])

    w1 = _fold_weight(params["w1"], s1, Cout_p, Cin_p, compute_dtype)
    w2 = _fold_weight(params["w2"], s2, Cout_p, Cout_p, compute_dtype)
    b1 = jnp.pad(b1, (0, Cout_p - Cout)).reshape(Cout_p, 1).astype(jnp.float32)
    b2 = jnp.pad(b2, (0, Cout_p - Cout)).reshape(Cout_p, 1).astype(jnp.float32)
    masks = _tap_masks(H, W, NB)

    # NCHW -> (N, C, H*W) is a free reshape (same memory layout); channels are
    # zero-padded so all in-kernel sublane stores are unmasked.
    x_flat = x_nchw.reshape(N, Cin, HW).astype(jnp.float32)
    x_flat = jnp.pad(x_flat, ((0, 0), (0, Cin_p - Cin), (0, 0)))

    kernel = functools.partial(_conv_block_kernel, W=W)
    NBHW = NB * HW
    ext_len = NBHW + 2 * MARGIN

    out = pl.pallas_call(
        kernel,
        out_shape=jax.ShapeDtypeStruct((N, Cout_p, HW), x_nchw.dtype),
        grid_spec=pltpu.PrefetchScalarGridSpec(
            num_scalar_prefetch=0,
            grid=(N // NB,),                 # both fused stages per grid step
            in_specs=[
                pl.BlockSpec((NB, Cin_p, HW), lambda n: (n, 0, 0)),
                pl.BlockSpec((9, NBHW), lambda n: (0, 0)),
                pl.BlockSpec((Cout_p, 9 * Cin_p), lambda n: (0, 0)),
                pl.BlockSpec((Cout_p, 1), lambda n: (0, 0)),
                pl.BlockSpec((Cout_p, 9 * Cout_p), lambda n: (0, 0)),
                pl.BlockSpec((Cout_p, 1), lambda n: (0, 0)),
            ],
            out_specs=pl.BlockSpec((NB, Cout_p, HW), lambda n: (n, 0, 0)),
            scratch_shapes=[
                pltpu.VMEM((Cin_p, ext_len), jnp.float32),     # stage-1 padded img
                pltpu.VMEM((9 * Cin_p, NBHW), compute_dtype),  # stage-1 im2col
                pltpu.VMEM((Cout_p, ext_len), jnp.float32),    # stage-2 padded img
                pltpu.VMEM((9 * Cout_p, NBHW), compute_dtype), # stage-2 im2col
            ],
        ),
        # "parallel" lets a multi-TC chip (v7x) shard the batch-block axis when
        # images_per_block < N; near-neutral on single-TC v5e/v6e.
        compiler_params=pltpu.CompilerParams(
            dimension_semantics=("parallel",)),
    )(x_flat, masks, w1, b1, w2, b2)

    return out[:, :Cout, :].reshape(N, Cout, H, W)


# ----------------------------------------------------------------------------
# Pure-JAX reference (for correctness checking of the kernel).
# ----------------------------------------------------------------------------
def _ref_stage(x_nchw, w_oihw, gamma, beta, rm, rv, eps=1e-5):
    y = lax.conv_general_dilated(
        x_nchw, w_oihw, window_strides=(1, 1), padding="SAME",
        dimension_numbers=("NCHW", "OIHW", "NCHW"))
    inv = gamma / jnp.sqrt(rv + eps)
    y = y * inv[None, :, None, None] + (beta - rm * inv)[None, :, None, None]
    return jnp.maximum(y, 0.0)


def conv_block_reference(x_nchw, params):
    y = _ref_stage(x_nchw, params["w1"], params["bn1_gamma"], params["bn1_beta"],
                   params["bn1_mean"], params["bn1_var"])
    y = _ref_stage(y, params["w2"], params["bn2_gamma"], params["bn2_beta"],
                   params["bn2_mean"], params["bn2_var"])
    return y


if __name__ == "__main__":
    # Small shapes consistent with conv_block(ch_in=4, ch_out=8) on 16x16 maps.
    N, C_in, C_out, H, W = 2, 4, 8, 16, 16

    key = jax.random.PRNGKey(0)
    keys = jax.random.split(key, 11)

    x = jax.random.normal(keys[0], (N, C_in, H, W), dtype=jnp.float32)

    params = {
        # Conv weights: (C_out, C_in, kH, kW), bias=False.
        "w1": 0.1 * jax.random.normal(keys[1], (C_out, C_in, 3, 3), jnp.float32),
        "w2": 0.1 * jax.random.normal(keys[2], (C_out, C_out, 3, 3), jnp.float32),
        # BatchNorm2d params / running stats (deterministic, non-trivial).
        "bn1_gamma": 1.0 + 0.1 * jax.random.normal(keys[3], (C_out,), jnp.float32),
        "bn1_beta": 0.1 * jax.random.normal(keys[4], (C_out,), jnp.float32),
        "bn1_mean": 0.05 * jax.random.normal(keys[5], (C_out,), jnp.float32),
        "bn1_var": jax.random.uniform(keys[6], (C_out,), jnp.float32, 0.5, 1.5),
        "bn2_gamma": 1.0 + 0.1 * jax.random.normal(keys[7], (C_out,), jnp.float32),
        "bn2_beta": 0.1 * jax.random.normal(keys[8], (C_out,), jnp.float32),
        "bn2_mean": 0.05 * jax.random.normal(keys[9], (C_out,), jnp.float32),
        "bn2_var": jax.random.uniform(keys[10], (C_out,), jnp.float32, 0.5, 1.5),
    }

    ref = jax.block_until_ready(conv_block_reference(x, params))

    # f32 MXU operands: tight check against the XLA reference.
    out_f32 = jax.block_until_ready(conv_block_forward(x, params))
    np.testing.assert_allclose(np.asarray(out_f32), np.asarray(ref),
                               rtol=1e-4, atol=1e-4)

    # bf16 MXU operands (native fast path on v6e/v7x), f32 accumulation.
    out_bf16 = jax.block_until_ready(
        conv_block_forward(x, params, compute_dtype=jnp.bfloat16))
    np.testing.assert_allclose(np.asarray(out_bf16), np.asarray(ref),
                               rtol=5e-2, atol=5e-2)

    print("KERNEL_OK")
</pallas_src>

<mosaic_0001>
module attributes {stable_mosaic.version = 11 : i64} {
  func.func @_conv_block_kernel(%arg0: i32, %arg1: memref<2x8x256xf32, #tpu.memory_space<vmem>>, %arg2: memref<9x512xf32, #tpu.memory_space<vmem>>, %arg3: memref<8x72xf32, #tpu.memory_space<vmem>>, %arg4: memref<8x1xf32, #tpu.memory_space<vmem>>, %arg5: memref<8x72xf32, #tpu.memory_space<vmem>>, %arg6: memref<8x1xf32, #tpu.memory_space<vmem>>, %arg7: memref<2x8x256xf32, #tpu.memory_space<vmem>>, %arg8: memref<8x768xf32, #tpu.memory_space<vmem>>, %arg9: memref<72x512xf32, #tpu.memory_space<vmem>>, %arg10: memref<8x768xf32, #tpu.memory_space<vmem>>, %arg11: memref<72x512xf32, #tpu.memory_space<vmem>>) attributes {dimension_semantics = [#tpu.dimension_semantics<parallel>], iteration_bounds = array<i64: 1>, scalar_prefetch = 0 : i64, scratch_operands = 4 : i64, tpu.core_type = #tpu.core_type<tc>, window_params = [{transform_indices = @transform_0, window_bounds = array<i64: 2, 8, 256>}, {pipeline_mode = #tpu.pipeline_mode<synchronous>, transform_indices = @transform_1, window_bounds = array<i64: 9, 512>}, {pipeline_mode = #tpu.pipeline_mode<synchronous>, transform_indices = @transform_2, window_bounds = array<i64: 8, 72>}, {pipeline_mode = #tpu.pipeline_mode<synchronous>, transform_indices = @transform_3, window_bounds = array<i64: 8, 1>}, {pipeline_mode = #tpu.pipeline_mode<synchronous>, transform_indices = @transform_4, window_bounds = array<i64: 8, 72>}, {pipeline_mode = #tpu.pipeline_mode<synchronous>, transform_indices = @transform_5, window_bounds = array<i64: 8, 1>}, {transform_indices = @transform_6, window_bounds = array<i64: 2, 8, 256>}]} {
    %c0_i32 = arith.constant 0 : i32
    %0 = arith.cmpi eq, %arg0, %c0_i32 : i32
    %1 = arith.extui %0 : i1 to i32
    %c0_i32_0 = arith.constant 0 : i32
    %2 = arith.cmpi ne, %1, %c0_i32_0 : i32
    scf.if %2 {
      %cst_116 = arith.constant 0.000000e+00 : f32
      %124 = vector.broadcast %cst_116 : f32 to vector<8x128xf32>
      %c0_117 = arith.constant 0 : index
      %c0_118 = arith.constant 0 : index
      %125 = vector.load %arg8[%c0_117, %c0_118] : memref<8x768xf32, #tpu.memory_space<vmem>>, vector<8x128xf32>
      tpu.vector_store %arg8[%c0_117, %c0_118], %124 {strides = array<i32>} : memref<8x768xf32, #tpu.memory_space<vmem>>, vector<8x128xf32>,
      %cst_119 = arith.constant 0.000000e+00 : f32
      %126 = vector.broadcast %cst_119 : f32 to vector<8x128xf32>
      %c0_120 = arith.constant 0 : index
      %c640 = arith.constant 640 : index
      %127 = vector.load %arg8[%c0_120, %c640] : memref<8x768xf32, #tpu.memory_space<vmem>>, vector<8x128xf32>
      tpu.vector_store %arg8[%c0_120, %c640], %126 {strides = array<i32>} : memref<8x768xf32, #tpu.memory_space<vmem>>, vector<8x128xf32>,
      %cst_121 = arith.constant 0.000000e+00 : f32
      %128 = vector.broadcast %cst_121 : f32 to vector<8x128xf32>
      %c0_122 = arith.constant 0 : index
      %c0_123 = arith.constant 0 : index
      %129 = vector.load %arg10[%c0_122, %c0_123] : memref<8x768xf32, #tpu.memory_space<vmem>>, vector<8x128xf32>
      tpu.vector_store %arg10[%c0_122, %c0_123], %128 {strides = array<i32>} : memref<8x768xf32, #tpu.memory_space<vmem>>, vector<8x128xf32>,
      %cst_124 = arith.constant 0.000000e+00 : f32
      %130 = vector.broadcast %cst_124 : f32 to vector<8x128xf32>
      %c0_125 = arith.constant 0 : index
      %c640_126 = arith.constant 640 : index
      %131 = vector.load %arg10[%c0_125, %c640_126] : memref<8x768xf32, #tpu.memory_space<vmem>>, vector<8x128xf32>
      tpu.vector_store %arg10[%c0_125, %c640_126], %130 {strides = array<i32>} : memref<8x768xf32, #tpu.memory_space<vmem>>, vector<8x128xf32>,
    } else {
    }
    %c0 = arith.constant 0 : index
    %c0_1 = arith.constant 0 : index
    %c0_2 = arith.constant 0 : index
    %3 = vector.load %arg1[%c0, %c0_1, %c0_2] : memref<2x8x256xf32, #tpu.memory_space<vmem>>, vector<1x8x256xf32>
    %4 = vector.shape_cast %3 : vector<1x8x256xf32> to vector<8x256xf32>
    %c0_3 = arith.constant 0 : index
    %c128 = arith.constant 128 : index
    %5 = vector.load %arg8[%c0_3, %c128] : memref<8x768xf32, #tpu.memory_space<vmem>>, vector<8x256xf32>
    tpu.vector_store %arg8[%c0_3, %c128], %4 {strides = array<i32>} : memref<8x768xf32, #tpu.memory_space<vmem>>, vector<8x256xf32>,
    %c1 = arith.constant 1 : index
    %c0_4 = arith.constant 0 : index
    %c0_5 = arith.constant 0 : index
    %6 = vector.load %arg1[%c1, %c0_4, %c0_5] : memref<2x8x256xf32, #tpu.memory_space<vmem>>, vector<1x8x256xf32>
    %7 = vector.shape_cast %6 : vector<1x8x256xf32> to vector<8x256xf32>
    %c0_6 = arith.constant 0 : index
    %c384 = arith.constant 384 : index
    %8 = vector.load %arg8[%c0_6, %c384] : memref<8x768xf32, #tpu.memory_space<vmem>>, vector<8x256xf32>
    tpu.vector_store %arg8[%c0_6, %c384], %7 {strides = array<i32>} : memref<8x768xf32, #tpu.memory_space<vmem>>, vector<8x256xf32>,
    %c0_7 = arith.constant 0 : index
    %c111 = arith.constant 111 : index
    %9 = vector.load %arg8[%c0_7, %c111] : memref<8x768xf32, #tpu.memory_space<vmem>>, vector<8x512xf32>
    %c0_8 = arith.constant 0 : index
    %c0_9 = arith.constant 0 : index
    %10 = vector.load %arg2[%c0_8, %c0_9] : memref<9x512xf32, #tpu.memory_space<vmem>>, vector<1x512xf32>
    %11 = vector.broadcast %10 : vector<1x512xf32> to vector<8x512xf32>
    %12 = arith.mulf %9, %11 : vector<8x512xf32>
    %c0_10 = arith.constant 0 : index
    %c0_11 = arith.constant 0 : index
    %13 = vector.load %arg9[%c0_10, %c0_11] : memref<72x512xf32, #tpu.memory_space<vmem>>, vector<8x512xf32>
    tpu.vector_store %arg9[%c0_10, %c0_11], %12 {strides = array<i32>} : memref<72x512xf32, #tpu.memory_space<vmem>>, vector<8x512xf32>,
    %c0_12 = arith.constant 0 : index
    %c112 = arith.constant 112 : index
    %14 = vector.load %arg8[%c0_12, %c112] : memref<8x768xf32, #tpu.memory_space<vmem>>, vector<8x512xf32>
    %c1_13 = arith.constant 1 : index
    %c0_14 = arith.constant 0 : index
    %15 = vector.load %arg2[%c1_13, %c0_14] : memref<9x512xf32, #tpu.memory_space<vmem>>, vector<1x512xf32>
    %16 = vector.broadcast %15 : vector<1x512xf32> to vector<8x512xf32>
    %17 = arith.mulf %14, %16 : vector<8x512xf32>
    %c8 = arith.constant 8 : index
    %c0_15 = arith.constant 0 : index
    %18 = vector.load %arg9[%c8, %c0_15] : memref<72x512xf32, #tpu.memory_space<vmem>>, vector<8x512xf32>
    tpu.vector_store %arg9[%c8, %c0_15], %17 {strides = array<i32>} : memref<72x512xf32, #tpu.memory_space<vmem>>, vector<8x512xf32>,
    %c0_16 = arith.constant 0 : index
    %c113 = arith.constant 113 : index
    %19 = vector.load %arg8[%c0_16, %c113] : memref<8x768xf32, #tpu.memory_space<vmem>>, vector<8x512xf32>
    %c2 = arith.constant 2 : index
    %c0_17 = arith.constant 0 : index
    %20 = vector.load %arg2[%c2, %c0_17] : memref<9x512xf32, #tpu.memory_space<vmem>>, vector<1x512xf32>
    %21 = vector.broadcast %20 : vector<1x512xf32> to vector<8x512xf32>
    %22 = arith.mulf %19, %21 : vector<8x512xf32>
    %c16 = arith.constant 16 : index
    %c0_18 = arith.constant 0 : index
    %23 = vector.load %arg9[%c16, %c0_18] : memref<72x512xf32, #tpu.memory_space<vmem>>, vector<8x512xf32>
    tpu.vector_store %arg9[%c16, %c0_18], %22 {strides = array<i32>} : memref<72x512xf32, #tpu.memory_space<vmem>>, vector<8x512xf32>,
    %c0_19 = arith.constant 0 : index
    %c127 = arith.constant 127 : index
    %24 = vector.load %arg8[%c0_19, %c127] : memref<8x768xf32, #tpu.memory_space<vmem>>, vector<8x512xf32>
    %c3 = arith.constant 3 : index
    %c0_20 = arith.constant 0 : index
    %25 = vector.load %arg2[%c3, %c0_20] : memref<9x512xf32, #tpu.memory_space<vmem>>, vector<1x512xf32>
    %26 = vector.broadcast %25 : vector<1x512xf32> to vector<8x512xf32>
    %27 = arith.mulf %24, %26 : vector<8x512xf32>
    %c24 = arith.constant 24 : index
    %c0_21 = arith.constant 0 : index
    %28 = vector.load %arg9[%c24, %c0_21] : memref<72x512xf32, #tpu.memory_space<vmem>>, vector<8x512xf32>
    tpu.vector_store %arg9[%c24, %c0_21], %27 {strides = array<i32>} : memref<72x512xf32, #tpu.memory_space<vmem>>, vector<8x512xf32>,
    %c0_22 = arith.constant 0 : index
    %c128_23 = arith.constant 128 : index
    %29 = vector.load %arg8[%c0_22, %c128_23] : memref<8x768xf32, #tpu.memory_space<vmem>>, vector<8x512xf32>
    %c4 = arith.constant 4 : index
    %c0_24 = arith.constant 0 : index
    %30 = vector.load %arg2[%c4, %c0_24] : memref<9x512xf32, #tpu.memory_space<vmem>>, vector<1x512xf32>
    %31 = vector.broadcast %30 : vector<1x512xf32> to vector<8x512xf32>
    %32 = arith.mulf %29, %31 : vector<8x512xf32>
    %c32 = arith.constant 32 : index
    %c0_25 = arith.constant 0 : index
    %33 = vector.load %arg9[%c32, %c0_25] : memref<72x512xf32, #tpu.memory_space<vmem>>, vector<8x512xf32>
    tpu.vector_store %arg9[%c32, %c0_25], %32 {strides = array<i32>} : memref<72x512xf32, #tpu.memory_space<vmem>>, vector<8x512xf32>,
    %c0_26 = arith.constant 0 : index
    %c129 = arith.constant 129 : index
    %34 = vector.load %arg8[%c0_26, %c129] : memref<8x768xf32, #tpu.memory_space<vmem>>, vector<8x512xf32>
    %c5 = arith.constant 5 : index
    %c0_27 = arith.constant 0 : index
    %35 = vector.load %arg2[%c5, %c0_27] : memref<9x512xf32, #tpu.memory_space<vmem>>, vector<1x512xf32>
    %36 = vector.broadcast %35 : vector<1x512xf32> to vector<8x512xf32>
    %37 = arith.mulf %34, %36 : vector<8x512xf32>
    %c40 = arith.constant 40 : index
    %c0_28 = arith.constant 0 : index
    %38 = vector.load %arg9[%c40, %c0_28] : memref<72x512xf32, #tpu.memory_space<vmem>>, vector<8x512xf32>
    tpu.vector_store %arg9[%c40, %c0_28], %37 {strides = array<i32>} : memref<72x512xf32, #tpu.memory_space<vmem>>, vector<8x512xf32>,
    %c0_29 = arith.constant 0 : index
    %c143 = arith.constant 143 : index
    %39 = vector.load %arg8[%c0_29, %c143] : memref<8x768xf32, #tpu.memory_space<vmem>>, vector<8x512xf32>
    %c6 = arith.constant 6 : index
    %c0_30 = arith.constant 0 : index
    %40 = vector.load %arg2[%c6, %c0_30] : memref<9x512xf32, #tpu.memory_space<vmem>>, vector<1x512xf32>
    %41 = vector.broadcast %40 : vector<1x512xf32> to vector<8x512xf32>
    %42 = arith.mulf %39, %41 : vector<8x512xf32>
    %c48 = arith.constant 48 : index
    %c0_31 = arith.constant 0 : index
    %43 = vector.load %arg9[%c48, %c0_31] : memref<72x512xf32, #tpu.memory_space<vmem>>, vector<8x512xf32>
    tpu.vector_store %arg9[%c48, %c0_31], %42 {strides = array<i32>} : memref<72x512xf32, #tpu.memory_space<vmem>>, vector<8x512xf32>,
    %c0_32 = arith.constant 0 : index
    %c144 = arith.constant 144 : index
    %44 = vector.load %arg8[%c0_32, %c144] : memref<8x768xf32, #tpu.memory_space<vmem>>, vector<8x512xf32>
    %c7 = arith.constant 7 : index
    %c0_33 = arith.constant 0 : index
    %45 = vector.load %arg2[%c7, %c0_33] : memref<9x512xf32, #tpu.memory_space<vmem>>, vector<1x512xf32>
    %46 = vector.broadcast %45 : vector<1x512xf32> to vector<8x512xf32>
    %47 = arith.mulf %44, %46 : vector<8x512xf32>
    %c56 = arith.constant 56 : index
    %c0_34 = arith.constant 0 : index
    %48 = vector.load %arg9[%c56, %c0_34] : memref<72x512xf32, #tpu.memory_space<vmem>>, vector<8x512xf32>
    tpu.vector_store %arg9[%c56, %c0_34], %47 {strides = array<i32>} : memref<72x512xf32, #tpu.memory_space<vmem>>, vector<8x512xf32>,
    %c0_35 = arith.constant 0 : index
    %c145 = arith.constant 145 : index
    %49 = vector.load %arg8[%c0_35, %c145] : memref<8x768xf32, #tpu.memory_space<vmem>>, vector<8x512xf32>
    %c8_36 = arith.constant 8 : index
    %c0_37 = arith.constant 0 : index
    %50 = vector.load %arg2[%c8_36, %c0_37] : memref<9x512xf32, #tpu.memory_space<vmem>>, vector<1x512xf32>
    %51 = vector.broadcast %50 : vector<1x512xf32> to vector<8x512xf32>
    %52 = arith.mulf %49, %51 : vector<8x512xf32>
    %c64 = arith.constant 64 : index
    %c0_38 = arith.constant 0 : index
    %53 = vector.load %arg9[%c64, %c0_38] : memref<72x512xf32, #tpu.memory_space<vmem>>, vector<8x512xf32>
    tpu.vector_store %arg9[%c64, %c0_38], %52 {strides = array<i32>} : memref<72x512xf32, #tpu.memory_space<vmem>>, vector<8x512xf32>,
    %c0_39 = arith.constant 0 : index
    %c0_40 = arith.constant 0 : index
    %54 = vector.load %arg3[%c0_39, %c0_40] : memref<8x72xf32, #tpu.memory_space<vmem>>, vector<8x72xf32>
    %c0_41 = arith.constant 0 : index
    %c0_42 = arith.constant 0 : index
    %55 = vector.load %arg9[%c0_41, %c0_42] : memref<72x512xf32, #tpu.memory_space<vmem>>, vector<72x512xf32>
    %cst = arith.constant dense<0.000000e+00> : vector<8x512xf32>
    %56 = tpu.matmul %54, %55, %cst {dimension_numbers = #tpu.dot_dimension_numbers<[1], [0], [0], [1], [0, 0, 1, 1], [], []>} : vector<8x72xf32>, vector<72x512xf32>, vector<8x512xf32> -> vector<8x512xf32>
    %c0_43 = arith.constant 0 : index
    %c0_44 = arith.constant 0 : index
    %57 = vector.load %arg4[%c0_43, %c0_44] : memref<8x1xf32, #tpu.memory_space<vmem>>, vector<8x1xf32>
    %58 = vector.broadcast %57 : vector<8x1xf32> to vector<8x512xf32>
    %59 = arith.addf %56, %58 : vector<8x512xf32>
    %cst_45 = arith.constant 0.000000e+00 : f32
    %60 = vector.broadcast %cst_45 : f32 to vector<8x512xf32>
    %61 = arith.maximumf %59, %60 : vector<8x512xf32>
    %c0_46 = arith.constant 0 : index
    %c128_47 = arith.constant 128 : index
    %62 = vector.load %arg10[%c0_46, %c128_47] : memref<8x768xf32, #tpu.memory_space<vmem>>, vector<8x512xf32>
    tpu.vector_store %arg10[%c0_46, %c128_47], %61 {strides = array<i32>} : memref<8x768xf32, #tpu.memory_space<vmem>>, vector<8x512xf32>,
    %c0_48 = arith.constant 0 : index
    %c111_49 = arith.constant 111 : index
    %63 = vector.load %arg10[%c0_48, %c111_49] : memref<8x768xf32, #tpu.memory_space<vmem>>, vector<8x512xf32>
    %c0_50 = arith.constant 0 : index
    %c0_51 = arith.constant 0 : index
    %64 = vector.load %arg2[%c0_50, %c0_51] : memref<9x512xf32, #tpu.memory_space<vmem>>, vector<1x512xf32>
    %65 = vector.broadcast %64 : vector<1x512xf32> to vector<8x512xf32>
    %66 = arith.mulf %63, %65 : vector<8x512xf32>
    %c0_52 = arith.constant 0 : index
    %c0_53 = arith.constant 0 : index
    %67 = vector.load %arg11[%c0_52, %c0_53] : memref<72x512xf32, #tpu.memory_space<vmem>>, vector<8x512xf32>
    tpu.vector_store %arg11[%c0_52, %c0_53], %66 {strides = array<i32>} : memref<72x512xf32, #tpu.memory_space<vmem>>, vector<8x512xf32>,
    %c0_54 = arith.constant 0 : index
    %c112_55 = arith.constant 112 : index
    %68 = vector.load %arg10[%c0_54, %c112_55] : memref<8x768xf32, #tpu.memory_space<vmem>>, vector<8x512xf32>
    %c1_56 = arith.constant 1 : index
    %c0_57 = arith.constant 0 : index
    %69 = vector.load %arg2[%c1_56, %c0_57] : memref<9x512xf32, #tpu.memory_space<vmem>>, vector<1x512xf32>
    %70 = vector.broadcast %69 : vector<1x512xf32> to vector<8x512xf32>
    %71 = arith.mulf %68, %70 : vector<8x512xf32>
    %c8_58 = arith.constant 8 : index
    %c0_59 = arith.constant 0 : index
    %72 = vector.load %arg11[%c8_58, %c0_59] : memref<72x512xf32, #tpu.memory_space<vmem>>, vector<8x512xf32>
    tpu.vector_store %arg11[%c8_58, %c0_59], %71 {strides = array<i32>} : memref<72x512xf32, #tpu.memory_space<vmem>>, vector<8x512xf32>,
    %c0_60 = arith.constant 0 : index
    %c113_61 = arith.constant 113 : index
    %73 = vector.load %arg10[%c0_60, %c113_61] : memref<8x768xf32, #tpu.memory_space<vmem>>, vector<8x512xf32>
    %c2_62 = arith.constant 2 : index
    %c0_63 = arith.constant 0 : index
    %74 = vector.load %arg2[%c2_62, %c0_63] : memref<9x512xf32, #tpu.memory_space<vmem>>, vector<1x512xf32>
    %75 = vector.broadcast %74 : vector<1x512xf32> to vector<8x512xf32>
    %76 = arith.mulf %73, %75 : vector<8x512xf32>
    %c16_64 = arith.constant 16 : index
    %c0_65 = arith.constant 0 : index
    %77 = vector.load %arg11[%c16_64, %c0_65] : memref<72x512xf32, #tpu.memory_space<vmem>>, vector<8x512xf32>
    tpu.vector_store %arg11[%c16_64, %c0_65], %76 {strides = array<i32>} : memref<72x512xf32, #tpu.memory_space<vmem>>, vector<8x512xf32>,
    %c0_66 = arith.constant 0 : index
    %c127_67 = arith.constant 127 : index
    %78 = vector.load %arg10[%c0_66, %c127_67] : memref<8x768xf32, #tpu.memory_space<vmem>>, vector<8x512xf32>
    %c3_68 = arith.constant 3 : index
    %c0_69 = arith.constant 0 : index
    %79 = vector.load %arg2[%c3_68, %c0_69] : memref<9x512xf32, #tpu.memory_space<vmem>>, vector<1x512xf32>
    %80 = vector.broadcast %79 : vector<1x512xf32> to vector<8x512xf32>
    %81 = arith.mulf %78, %80 : vector<8x512xf32>
    %c24_70 = arith.constant 24 : index
    %c0_71 = arith.constant 0 : index
    %82 = vector.load %arg11[%c24_70, %c0_71] : memref<72x512xf32, #tpu.memory_space<vmem>>, vector<8x512xf32>
    tpu.vector_store %arg11[%c24_70, %c0_71], %81 {strides = array<i32>} : memref<72x512xf32, #tpu.memory_space<vmem>>, vector<8x512xf32>,
    %c0_72 = arith.constant 0 : index
    %c128_73 = arith.constant 128 : index
    %83 = vector.load %arg10[%c0_72, %c128_73] : memref<8x768xf32, #tpu.memory_space<vmem>>, vector<8x512xf32>
    %c4_74 = arith.constant 4 : index
    %c0_75 = arith.constant 0 : index
    %84 = vector.load %arg2[%c4_74, %c0_75] : memref<9x512xf32, #tpu.memory_space<vmem>>, vector<1x512xf32>
    %85 = vector.broadcast %84 : vector<1x512xf32> to vector<8x512xf32>
    %86 = arith.mulf %83, %85 : vector<8x512xf32>
    %c32_76 = arith.constant 32 : index
    %c0_77 = arith.constant 0 : index
    %87 = vector.load %arg11[%c32_76, %c0_77] : memref<72x512xf32, #tpu.memory_space<vmem>>, vector<8x512xf32>
    tpu.vector_store %arg11[%c32_76, %c0_77], %86 {strides = array<i32>} : memref<72x512xf32, #tpu.memory_space<vmem>>, vector<8x512xf32>,
    %c0_78 = arith.constant 0 : index
    %c129_79 = arith.constant 129 : index
    %88 = vector.load %arg10[%c0_78, %c129_79] : memref<8x768xf32, #tpu.memory_space<vmem>>, vector<8x512xf32>
    %c5_80 = arith.constant 5 : index
    %c0_81 = arith.constant 0 : index
    %89 = vector.load %arg2[%c5_80, %c0_81] : memref<9x512xf32, #tpu.memory_space<vmem>>, vector<1x512xf32>
    %90 = vector.broadcast %89 : vector<1x512xf32> to vector<8x512xf32>
    %91 = arith.mulf %88, %90 : vector<8x512xf32>
    %c40_82 = arith.constant 40 : index
    %c0_83 = arith.constant 0 : index
    %92 = vector.load %arg11[%c40_82, %c0_83] : memref<72x512xf32, #tpu.memory_space<vmem>>, vector<8x512xf32>
    tpu.vector_store %arg11[%c40_82, %c0_83], %91 {strides = array<i32>} : memref<72x512xf32, #tpu.memory_space<vmem>>, vector<8x512xf32>,
    %c0_84 = arith.constant 0 : index
    %c143_85 = arith.constant 143 : index
    %93 = vector.load %arg10[%c0_84, %c143_85] : memref<8x768xf32, #tpu.memory_space<vmem>>, vector<8x512xf32>
    %c6_86 = arith.constant 6 : index
    %c0_87 = arith.constant 0 : index
    %94 = vector.load %arg2[%c6_86, %c0_87] : memref<9x512xf32, #tpu.memory_space<vmem>>, vector<1x512xf32>
    %95 = vector.broadcast %94 : vector<1x512xf32> to vector<8x512xf32>
    %96 = arith.mulf %93, %95 : vector<8x512xf32>
    %c48_88 = arith.constant 48 : index
    %c0_89 = arith.constant 0 : index
    %97 = vector.load %arg11[%c48_88, %c0_89] : memref<72x512xf32, #tpu.memory_space<vmem>>, vector<8x512xf32>
    tpu.vector_store %arg11[%c48_88, %c0_89], %96 {strides = array<i32>} : memref<72x512xf32, #tpu.memory_space<vmem>>, vector<8x512xf32>,
    %c0_90 = arith.constant 0 : index
    %c144_91 = arith.constant 144 : index
    %98 = vector.load %arg10[%c0_90, %c144_91] : memref<8x768xf32, #tpu.memory_space<vmem>>, vector<8x512xf32>
    %c7_92 = arith.constant 7 : index
    %c0_93 = arith.constant 0 : index
    %99 = vector.load %arg2[%c7_92, %c0_93] : memref<9x512xf32, #tpu.memory_space<vmem>>, vector<1x512xf32>
    %100 = vector.broadcast %99 : vector<1x512xf32> to vector<8x512xf32>
    %101 = arith.mulf %98, %100 : vector<8x512xf32>
    %c56_94 = arith.constant 56 : index
    %c0_95 = arith.constant 0 : index
    %102 = vector.load %arg11[%c56_94, %c0_95] : memref<72x512xf32, #tpu.memory_space<vmem>>, vector<8x512xf32>
    tpu.vector_store %arg11[%c56_94, %c0_95], %101 {strides = array<i32>} : memref<72x512xf32, #tpu.memory_space<vmem>>, vector<8x512xf32>,
    %c0_96 = arith.constant 0 : index
    %c145_97 = arith.constant 145 : index
    %103 = vector.load %arg10[%c0_96, %c145_97] : memref<8x768xf32, #tpu.memory_space<vmem>>, vector<8x512xf32>
    %c8_98 = arith.constant 8 : index
    %c0_99 = arith.constant 0 : index
    %104 = vector.load %arg2[%c8_98, %c0_99] : memref<9x512xf32, #tpu.memory_space<vmem>>, vector<1x512xf32>
    %105 = vector.broadcast %104 : vector<1x512xf32> to vector<8x512xf32>
    %106 = arith.mulf %103, %105 : vector<8x512xf32>
    %c64_100 = arith.constant 64 : index
    %c0_101 = arith.constant 0 : index
    %107 = vector.load %arg11[%c64_100, %c0_101] : memref<72x512xf32, #tpu.memory_space<vmem>>, vector<8x512xf32>
    tpu.vector_store %arg11[%c64_100, %c0_101], %106 {strides = array<i32>} : memref<72x512xf32, #tpu.memory_space<vmem>>, vector<8x512xf32>,
    %c0_102 = arith.constant 0 : index
    %c0_103 = arith.constant 0 : index
    %108 = vector.load %arg5[%c0_102, %c0_103] : memref<8x72xf32, #tpu.memory_space<vmem>>, vector<8x72xf32>
    %c0_104 = arith.constant 0 : index
    %c0_105 = arith.constant 0 : index
    %109 = vector.load %arg11[%c0_104, %c0_105] : memref<72x512xf32, #tpu.memory_space<vmem>>, vector<72x512xf32>
    %cst_106 = arith.constant dense<0.000000e+00> : vector<8x512xf32>
    %110 = tpu.matmul %108, %109, %cst_106 {dimension_numbers = #tpu.dot_dimension_numbers<[1], [0], [0], [1], [0, 0, 1, 1], [], []>} : vector<8x72xf32>, vector<72x512xf32>, vector<8x512xf32> -> vector<8x512xf32>
    %c0_107 = arith.constant 0 : index
    %c0_108 = arith.constant 0 : index
    %111 = vector.load %arg6[%c0_107, %c0_108] : memref<8x1xf32, #tpu.memory_space<vmem>>, vector<8x1xf32>
    %112 = vector.broadcast %111 : vector<8x1xf32> to vector<8x512xf32>
    %113 = arith.addf %110, %112 : vector<8x512xf32>
    %cst_109 = arith.constant 0.000000e+00 : f32
    %114 = vector.broadcast %cst_109 : f32 to vector<8x512xf32>
    %115 = arith.maximumf %113, %114 : vector<8x512xf32>
    %116 = vector.extract_strided_slice %115 {offsets = [0, 0], sizes = [8, 256], strides = [1, 1]} : vector<8x512xf32> to vector<8x256xf32>
    %c0_110 = arith.constant 0 : index
    %c0_111 = arith.constant 0 : index
    %c0_112 = arith.constant 0 : index
    %117 = vector.load %arg7[%c0_110, %c0_111, %c0_112] : memref<2x8x256xf32, #tpu.memory_space<vmem>>, vector<1x8x256xf32>
    %118 = vector.shape_cast %117 : vector<1x8x256xf32> to vector<8x256xf32>
    %119 = vector.shape_cast %116 : vector<8x256xf32> to vector<1x8x256xf32>
    tpu.vector_store %arg7[%c0_110, %c0_111, %c0_112], %119 {strides = array<i32>} : memref<2x8x256xf32, #tpu.memory_space<vmem>>, vector<1x8x256xf32>,
    %120 = vector.extract_strided_slice %115 {offsets = [0, 256], sizes = [8, 256], strides = [1, 1]} : vector<8x512xf32> to vector<8x256xf32>
    %c1_113 = arith.constant 1 : index
    %c0_114 = arith.constant 0 : index
    %c0_115 = arith.constant 0 : index
    %121 = vector.load %arg7[%c1_113, %c0_114, %c0_115] : memref<2x8x256xf32, #tpu.memory_space<vmem>>, vector<1x8x256xf32>
    %122 = vector.shape_cast %121 : vector<1x8x256xf32> to vector<8x256xf32>
    %123 = vector.shape_cast %120 : vector<8x256xf32> to vector<1x8x256xf32>
    tpu.vector_store %arg7[%c1_113, %c0_114, %c0_115], %123 {strides = array<i32>} : memref<2x8x256xf32, #tpu.memory_space<vmem>>, vector<1x8x256xf32>,
    return
  }
  func.func @transform_0(%arg0: i32) -> (i32, i32, i32) {
    %c0_i32 = arith.constant 0 : i32
    %c0_i32_0 = arith.constant 0 : i32
    %c0_i32_1 = arith.constant 0 : i32
    return %arg0, %c0_i32, %c0_i32_0 : i32, i32, i32
  }
  func.func @transform_1(%arg0: i32) -> (i32, i32) {
    %c0_i32 = arith.constant 0 : i32
    %c0_i32_0 = arith.constant 0 : i32
    %c0_i32_1 = arith.constant 0 : i32
    return %c0_i32, %c0_i32_0 : i32, i32
  }
  func.func @transform_2(%arg0: i32) -> (i32, i32) {
    %c0_i32 = arith.constant 0 : i32
    %c0_i32_0 = arith.constant 0 : i32
    %c0_i32_1 = arith.constant 0 : i32
    return %c0_i32, %c0_i32_0 : i32, i32
  }
  func.func @transform_3(%arg0: i32) -> (i32, i32) {
    %c0_i32 = arith.constant 0 : i32
    %c0_i32_0 = arith.constant 0 : i32
    %c0_i32_1 = arith.constant 0 : i32
    return %c0_i32, %c0_i32_0 : i32, i32
  }
  func.func @transform_4(%arg0: i32) -> (i32, i32) {
    %c0_i32 = arith.constant 0 : i32
    %c0_i32_0 = arith.constant 0 : i32
    %c0_i32_1 = arith.constant 0 : i32
    return %c0_i32, %c0_i32_0 : i32, i32
  }
  func.func @transform_5(%arg0: i32) -> (i32, i32) {
    %c0_i32 = arith.constant 0 : i32
    %c0_i32_0 = arith.constant 0 : i32
    %c0_i32_1 = arith.constant 0 : i32
    return %c0_i32, %c0_i32_0 : i32, i32
  }
  func.func @transform_6(%arg0: i32) -> (i32, i32, i32) {
    %c0_i32 = arith.constant 0 : i32
    %c0_i32_0 = arith.constant 0 : i32
    %c0_i32_1 = arith.constant 0 : i32
    return %arg0, %c0_i32, %c0_i32_0 : i32, i32, i32
  }
}

</mosaic_0001>

<llo_original>
// kernel: tpu_custom_call.1
$region0: #{tpu_custom_call.1}
  #allocation0 [shape = 'u32[]', space=smem, size = 0x4, offset = 0x4, fixed_abs, tag = 'smem constant byte address 0x4 - core index']
  #allocation1 [shape = 'u32[72,128]{1,0:T(1,128)}', space=vmem, size = 0x9000, scoped, tag = 'internal scratch']
  #allocation2 [shape = 'f32[8,768]{1,0:T(8,128)}', space=vmem, size = 0x6000, scoped, tag = 'scratch operand']
  #allocation3 [shape = 'f32[72,512]{1,0:T(8,128)}', space=vmem, size = 0x24000, scoped, tag = 'scratch operand']
  #allocation4 [shape = 'f32[8,768]{1,0:T(8,128)}', space=vmem, size = 0x6000, scoped, tag = 'scratch operand']
  #allocation5 [shape = 'f32[72,512]{1,0:T(8,128)}', space=vmem, size = 0x24000, scoped, tag = 'scratch operand']
  %s0 = inlined_call_operand.hbm [shape: f32[2,8,256], index: 0, kind: input, shape index: {}]
  %s1 = inlined_call_operand.hbm [shape: f32[9,512], index: 1, kind: input, shape index: {}]
  %s2 = inlined_call_operand.vmem [shape: f32[8,72], index: 2, kind: input, shape index: {}]
  %s3 = inlined_call_operand.vmem [shape: f32[8,1], index: 3, kind: input, shape index: {}]
  %s4 = inlined_call_operand.vmem [shape: f32[8,72], index: 4, kind: input, shape index: {}]
  %s5 = inlined_call_operand.vmem [shape: f32[8,1], index: 5, kind: input, shape index: {}]
  %s6 = inlined_call_operand.hbm [shape: f32[2,8,256], index: 6, kind: output, shape index: {}]
  %s7 = sld [smem:[#allocation0]]
  $region46: #{tpu_custom_call.1} parent=0
    _
  %s9 = ssub.s32 1, %s7
  %s10 = scalar_select 0, %s9, %s7
  $region1: #{tpu_custom_call.1} parent=0
    #allocation6 [shape = 'u8[16384]{0}', space=vmem, size = 0x4000, scoped, tag = 'input window, operand 0, single buffered']
    #allocation7 [shape = 's32[1]{0}', space=sflag, size = 0x4, scoped, tag = 'scoped memory for tpu_custom_call.1']
    #allocation8 [shape = 's32[1]{0}', space=sflag, size = 0x4, scoped, tag = 'scoped memory for tpu_custom_call.1']
    #allocation9 [shape = 'u8[32768]{0}', space=vmem, size = 0x8000, scoped, tag = 'input window, operand 1, single buffered']
    #allocation10 [shape = 's32[1]{0}', space=sflag, size = 0x4, scoped, tag = 'scoped memory for tpu_custom_call.1']
    #allocation11 [shape = 'u8[16384]{0}', space=vmem, size = 0x4000, scoped, tag = 'output window, operand 0, single buffered']
    %11 = vsyncpa [#allocation7], 0
    %12 = vsyncpa [#allocation10], 0
    %13 = vsyncpa [#allocation8], 0
    // Predicated region
    $region2: #{tpu_custom_call.1} parent=1 // pred_check
      _
    $region3: #{tpu_custom_call.1} parent=1 // pred_check_branch
      %15 = sbr.rel (0) target = $region5
    $region4: #{tpu_custom_call.1} parent=1 // pred_region
      %17 = vsyncadd [#allocation7], 0
      %s18 = sshll.u32 %s0, 4
      %s19 = int_to_ptr.hbm [resolvable:$true] %s18
      %s20 = sshll.u32 [#allocation6], 4
      %s21 = int_to_ptr.vmem [resolvable:$true] %s20
      %26 = dma.hbm_to_vmem [thread:$0]  %s19, 512, %s21, [#allocation7], 256, 256, 16
    $region5: #{tpu_custom_call.1} parent=1 // pred_fallthru
      _
    // Predicated region
    $region6: #{tpu_custom_call.1} parent=1 // pred_check
      _
    $region7: #{tpu_custom_call.1} parent=1 // pred_check_branch
      %28 = sbr.rel (0) target = $region9
    $region8: #{tpu_custom_call.1} parent=1 // pred_region
      %30 = vsyncadd [#allocation10], 0
      %s31 = sshll.u32 %s1, 4
      %s32 = int_to_ptr.hbm [resolvable:$true] %s31
      %s33 = sshll.u32 [#allocation9], 4
      %s34 = int_to_ptr.vmem [resolvable:$true] %s33
      %39 = dma.hbm_to_vmem [thread:$0]  %s32, 1024, %s34, [#allocation10], 512, 512, 32
    $region9: #{tpu_custom_call.1} parent=1 // pred_fallthru
      _
    // Predicated region
    $region10: #{tpu_custom_call.1} parent=1 // pred_check
      _
    $region11: #{tpu_custom_call.1} parent=1 // pred_check_branch
      %41 = sbr.rel (0) target = $region13
    $region12: #{tpu_custom_call.1} parent=1 // pred_region
      _
    $region13: #{tpu_custom_call.1} parent=1 // pred_fallthru
      _
    // Predicated region
    $region14: #{tpu_custom_call.1} parent=1 // pred_check
      _
    $region15: #{tpu_custom_call.1} parent=1 // pred_check_branch
      %43 = sbr.rel (0) target = $region17
    $region16: #{tpu_custom_call.1} parent=1 // pred_region
      _
    $region17: #{tpu_custom_call.1} parent=1 // pred_fallthru
      _
    // Predicated region
    $region18: #{tpu_custom_call.1} parent=1 // pred_check
      _
    $region19: #{tpu_custom_call.1} parent=1 // pred_check_branch
      %45 = sbr.rel (0) target = $region21
    $region20: #{tpu_custom_call.1} parent=1 // pred_region
      _
    $region21: #{tpu_custom_call.1} parent=1 // pred_fallthru
      _
    // Predicated region
    $region22: #{tpu_custom_call.1} parent=1 // pred_check
      _
    $region23: #{tpu_custom_call.1} parent=1 // pred_check_branch
      %47 = sbr.rel (0) target = $region25
    $region24: #{tpu_custom_call.1} parent=1 // pred_region
      _
    $region25: #{tpu_custom_call.1} parent=1 // pred_fallthru
      _
    // Predicated region
    $region26: #{tpu_custom_call.1} parent=1 // pred_check
      _
    $region27: #{tpu_custom_call.1} parent=1 // pred_check_branch
      %49 = sbr.rel (0) target = $region29
    $region28: #{tpu_custom_call.1} parent=1 // pred_region
      %51 = dma.done [#allocation7], 512
    $region29: #{tpu_custom_call.1} parent=1 // pred_fallthru
      _
    // Predicated region
    $region30: #{tpu_custom_call.1} parent=1 // pred_check
      _
    $region31: #{tpu_custom_call.1} parent=1 // pred_check_branch
      %53 = sbr.rel (0) target = $region33
    $region32: #{tpu_custom_call.1} parent=1 // pred_region
      %55 = dma.done [#allocation10], 1024
    $region33: #{tpu_custom_call.1} parent=1 // pred_fallthru
      _
    %p56 = scmp.eq.s32.totalorder 0, 0
    // Predicated region
    $region34: #{tpu_custom_call.1} parent=1 // pred_check
      %p57 = pneg %p56
    $region35: #{tpu_custom_call.1} parent=1 // pred_check_branch
      %59 = sbr.rel (%p57) target = $region37
    $region36: #{tpu_custom_call.1} parent=1 // pred_region
      %60 = vst [vmem:[#allocation2] sm:$0xff] 0.0
      %61 = vst [vmem:[#allocation2 + $0x28] sm:$0xff] 0.0
      %62 = vst [vmem:[#allocation4] sm:$0xff] 0.0
      %63 = vst [vmem:[#allocation4 + $0x28] sm:$0xff] 0.0
    $region37: #{tpu_custom_call.1} parent=1 // pred_fallthru
      _
    %v64 = vld [vmem:[#allocation6] sm:$0xff]
    %v65 = vld [vmem:[#allocation6 + $0x8] sm:$0xff]
    %66 = vst [vmem:[#allocation2 + $0x8] sm:$0xff] %v64
    %67 = vst [vmem:[#allocation2 + $0x10] sm:$0xff] %v65
    %s68 = scalar_lea.vmem [#allocation6], 16
    %v69 = vld [vmem:[%s68] sm:$0xff]
    %v70 = vld [vmem:[%s68 + $0x8] sm:$0xff]
    %71 = vst [vmem:[#allocation2 + $0x18] sm:$0xff] %v69
    %72 = vst [vmem:[#allocation2 + $0x20] sm:$0xff] %v70
    %v73 = vld [vmem:[#allocation2] sm:$0xff]
    %v74 = vld [vmem:[#allocation2 + $0x8] sm:$0xff]
    %v75 = vld [vmem:[#allocation2 + $0x10] sm:$0xff]
    %v76 = vld [vmem:[#allocation2 + $0x18] sm:$0xff]
    %v77 = vld [vmem:[#allocation2 + $0x20] sm:$0xff]
    %v78 = vld [vmem:[#allocation9] ss:$8 sm:$0xf]
    %v80 = vperm.slane %v78, 0
    %v81 = vperm.slane %v78, 1
    %v82 = vperm.slane %v78, 2
    %v83 = vperm.slane %v78, 3
    %84 = vrot.lane.b32.xlu0 %v80, 111
    %v85 = vpop.permute.xlu0 %84
    %86 = vrot.lane.b32.xlu0 %v81, 111
    %v87 = vpop.permute.xlu0 %86
    %88 = vrot.lane.b32.xlu0 %v82, 111
    %v89 = vpop.permute.xlu0 %88
    %90 = vrot.lane.b32.xlu0 %v83, 111
    %v91 = vpop.permute.xlu0 %90
    %vm92 = vcmask 908288
    %v93 = vsel %vm92, %v85, %v87
    %v94 = vsel %vm92, %v87, %v89
    %v95 = vsel %vm92, %v89, %v91
    %v101 = vmul.f32 %v73, %v85
    %v102 = vmul.f32 %v74, %v93
    %v103 = vmul.f32 %v75, %v94
    %v104 = vmul.f32 %v76, %v95
    %v105 = vmul.f32 %v77, %v91
    %111 = vrot.lane.b32.xlu0 %v101, 17
    %v112 = vpop.permute.xlu0 %111
    %113 = vrot.lane.b32.xlu0 %v102, 17
    %v114 = vpop.permute.xlu0 %113
    %115 = vrot.lane.b32.xlu0 %v103, 17
    %v116 = vpop.permute.xlu0 %115
    %117 = vrot.lane.b32.xlu0 %v104, 17
    %v118 = vpop.permute.xlu0 %117
    %119 = vrot.lane.b32.xlu0 %v105, 17
    %v120 = vpop.permute.xlu0 %119
    %vm121 = vcmask 138240
    %v122 = vsel %vm121, %v112, %v114
    %v123 = vsel %vm121, %v114, %v116
    %v124 = vsel %vm121, %v116, %v118
    %v125 = vsel %vm121, %v118, %v120
    %130 = vst [vmem:[#allocation3] sm:$0xff] %v122
    %131 = vst [vmem:[#allocation3 + $0x8] sm:$0xff] %v123
    %132 = vst [vmem:[#allocation3 + $0x10] sm:$0xff] %v124
    %133 = vst [vmem:[#allocation3 + $0x18] sm:$0xff] %v125
    %v134 = vld [vmem:[#allocation2] sm:$0xff]
    %v135 = vld [vmem:[#allocation2 + $0x8] sm:$0xff]
    %v136 = vld [vmem:[#allocation2 + $0x10] sm:$0xff]
    %v137 = vld [vmem:[#allocation2 + $0x18] sm:$0xff]
    %v138 = vld [vmem:[#allocation2 + $0x20] sm:$0xff]
    %s139 = scalar_lea.vmem [#allocation9], 1
    %v140 = vld [vmem:[%s139] ss:$8 sm:$0xf]
    %v142 = vperm.slane %v140, 0
    %v143 = vperm.slane %v140, 1
    %v144 = vperm.slane %v140, 2
    %v145 = vperm.slane %v140, 3
    %146 = vrot.lane.b32.xlu0 %v142, 112
    %v147 = vpop.permute.xlu0 %146
    %148 = vrot.lane.b32.xlu0 %v143, 112
    %v149 = vpop.permute.xlu0 %148
    %150 = vrot.lane.b32.xlu0 %v144, 112
    %v151 = vpop.permute.xlu0 %150
    %152 = vrot.lane.b32.xlu0 %v145, 112
    %v153 = vpop.permute.xlu0 %152
    %vm154 = vcmask 916480
    %v155 = vsel %vm154, %v147, %v149
    %v156 = vsel %vm154, %v149, %v151
    %v157 = vsel %vm154, %v151, %v153
    %v163 = vmul.f32 %v134, %v147
    %v164 = vmul.f32 %v135, %v155
    %v165 = vmul.f32 %v136, %v156
    %v166 = vmul.f32 %v137, %v157
    %v167 = vmul.f32 %v138, %v153
    %173 = vrot.lane.b32.xlu0 %v163, 16
    %v174 = vpop.permute.xlu0 %173
    %175 = vrot.lane.b32.xlu0 %v164, 16
    %v176 = vpop.permute.xlu0 %175
    %177 = vrot.lane.b32.xlu0 %v165, 16
    %v178 = vpop.permute.xlu0 %177
    %179 = vrot.lane.b32.xlu0 %v166, 16
    %v180 = vpop.permute.xlu0 %179
    %181 = vrot.lane.b32.xlu0 %v167, 16
    %v182 = vpop.permute.xlu0 %181
    %vm183 = vcmask 130048
    %v184 = vsel %vm183, %v174, %v176
    %v185 = vsel %vm183, %v176, %v178
    %v186 = vsel %vm183, %v178, %v180
    %v187 = vsel %vm183, %v180, %v182
    %192 = vst [vmem:[#allocation3 + $0x20] sm:$0xff] %v184
    %193 = vst [vmem:[#allocation3 + $0x28] sm:$0xff] %v185
    %194 = vst [vmem:[#allocation3 + $0x30] sm:$0xff] %v186
    %195 = vst [vmem:[#allocation3 + $0x38] sm:$0xff] %v187
    %v196 = vld [vmem:[#allocation2] sm:$0xff]
    %v197 = vld [vmem:[#allocation2 + $0x8] sm:$0xff]
    %v198 = vld [vmem:[#allocation2 + $0x10] sm:$0xff]
    %v199 = vld [vmem:[#allocation2 + $0x18] sm:$0xff]
    %v200 = vld [vmem:[#allocation2 + $0x20] sm:$0xff]
    %s201 = scalar_lea.vmem [#allocation9], 2
    %v202 = vld [vmem:[%s201] ss:$8 sm:$0xf]
    %v204 = vperm.slane %v202, 0
    %v205 = vperm.slane %v202, 1
    %v206 = vperm.slane %v202, 2
    %v207 = vperm.slane %v202, 3
    %208 = vrot.lane.b32.xlu0 %v204, 113
    %v209 = vpop.permute.xlu0 %208
    %210 = vrot.lane.b32.xlu0 %v205, 113
    %v211 = vpop.permute.xlu0 %210
    %212 = vrot.lane.b32.xlu0 %v206, 113
    %v213 = vpop.permute.xlu0 %212
    %214 = vrot.lane.b32.xlu0 %v207, 113
    %v215 = vpop.permute.xlu0 %214
    %vm216 = vcmask 924672
    %v217 = vsel %vm216, %v209, %v211
    %v218 = vsel %vm216, %v211, %v213
    %v219 = vsel %vm216, %v213, %v215
    %v225 = vmul.f32 %v196, %v209
    %v226 = vmul.f32 %v197, %v217
    %v227 = vmul.f32 %v198, %v218
    %v228 = vmul.f32 %v199, %v219
    %v229 = vmul.f32 %v200, %v215
    %235 = vrot.lane.b32.xlu0 %v225, 15
    %v236 = vpop.permute.xlu0 %235
    %237 = vrot.lane.b32.xlu0 %v226, 15
    %v238 = vpop.permute.xlu0 %237
    %239 = vrot.lane.b32.xlu0 %v227, 15
    %v240 = vpop.permute.xlu0 %239
    %241 = vrot.lane.b32.xlu0 %v228, 15
    %v242 = vpop.permute.xlu0 %241
    %243 = vrot.lane.b32.xlu0 %v229, 15
    %v244 = vpop.permute.xlu0 %243
    %vm245 = vcmask 121856
    %v246 = vsel %vm245, %v236, %v238
    %v247 = vsel %vm245, %v238, %v240
    %v248 = vsel %vm245, %v240, %v242
    %v249 = vsel %vm245, %v242, %v244
    %254 = vst [vmem:[#allocation3 + $0x40] sm:$0xff] %v246
    %255 = vst [vmem:[#allocation3 + $0x48] sm:$0xff] %v247
    %256 = vst [vmem:[#allocation3 + $0x50] sm:$0xff] %v248
    %257 = vst [vmem:[#allocation3 + $0x58] sm:$0xff] %v249
    %v258 = vld [vmem:[#allocation2] sm:$0xff]
    %v259 = vld [vmem:[#allocation2 + $0x8] sm:$0xff]
    %v260 = vld [vmem:[#allocation2 + $0x10] sm:$0xff]
    %v261 = vld [vmem:[#allocation2 + $0x18] sm:$0xff]
    %v262 = vld [vmem:[#allocation2 + $0x20] sm:$0xff]
    %s263 = scalar_lea.vmem [#allocation9], 3
    %v264 = vld [vmem:[%s263] ss:$8 sm:$0xf]
    %v266 = vperm.slane %v264, 0
    %v267 = vperm.slane %v264, 1
    %v268 = vperm.slane %v264, 2
    %v269 = vperm.slane %v264, 3
    %270 = vrot.lane.b32.xlu0 %v266, 127
    %v271 = vpop.permute.xlu0 %270
    %272 = vrot.lane.b32.xlu0 %v267, 127
    %v273 = vpop.permute.xlu0 %272
    %274 = vrot.lane.b32.xlu0 %v268, 127
    %v275 = vpop.permute.xlu0 %274
    %276 = vrot.lane.b32.xlu0 %v269, 127
    %v277 = vpop.permute.xlu0 %276
    %vm278 = vcmask 1039360
    %v279 = vsel %vm278, %v271, %v273
    %v280 = vsel %vm278, %v273, %v275
    %v281 = vsel %vm278, %v275, %v277
    %v287 = vmul.f32 %v258, %v271
    %v288 = vmul.f32 %v259, %v279
    %v289 = vmul.f32 %v260, %v280
    %v290 = vmul.f32 %v261, %v281
    %v291 = vmul.f32 %v262, %v277
    %297 = vrot.lane.b32.xlu0 %v287, 1
    %v298 = vpop.permute.xlu0 %297
    %299 = vrot.lane.b32.xlu0 %v288, 1
    %v300 = vpop.permute.xlu0 %299
    %301 = vrot.lane.b32.xlu0 %v289, 1
    %v302 = vpop.permute.xlu0 %301
    %303 = vrot.lane.b32.xlu0 %v290, 1
    %v304 = vpop.permute.xlu0 %303
    %305 = vrot.lane.b32.xlu0 %v291, 1
    %v306 = vpop.permute.xlu0 %305
    %vm307 = vcmask 7168
    %v308 = vsel %vm307, %v298, %v300
    %v309 = vsel %vm307, %v300, %v302
    %v310 = vsel %vm307, %v302, %v304
    %v311 = vsel %vm307, %v304, %v306
    %316 = vst [vmem:[#allocation3 + $0x60] sm:$0xff] %v308
    %317 = vst [vmem:[#allocation3 + $0x68] sm:$0xff] %v309
    %318 = vst [vmem:[#allocation3 + $0x70] sm:$0xff] %v310
    %319 = vst [vmem:[#allocation3 + $0x78] sm:$0xff] %v311
    %v320 = vld [vmem:[#allocation2 + $0x8] sm:$0xff]
    %v321 = vld [vmem:[#allocation2 + $0x10] sm:$0xff]
    %v322 = vld [vmem:[#allocation2 + $0x18] sm:$0xff]
    %v323 = vld [vmem:[#allocation2 + $0x20] sm:$0xff]
    %s324 = scalar_lea.vmem [#allocation9], 4
    %v325 = vld [vmem:[%s324] ss:$8 sm:$0xf]
    %v327 = vperm.slane %v325, 0
    %v328 = vperm.slane %v325, 1
    %v329 = vperm.slane %v325, 2
    %v330 = vperm.slane %v325, 3
    %v335 = vmul.f32 %v320, %v327
    %v336 = vmul.f32 %v321, %v328
    %v337 = vmul.f32 %v322, %v329
    %v338 = vmul.f32 %v323, %v330
    %339 = vst [vmem:[#allocation3 + $0x80] sm:$0xff] %v335
    %340 = vst [vmem:[#allocation3 + $0x88] sm:$0xff] %v336
    %341 = vst [vmem:[#allocation3 + $0x90] sm:$0xff] %v337
    %342 = vst [vmem:[#allocation3 + $0x98] sm:$0xff] %v338
    %v343 = vld [vmem:[#allocation2 + $0x8] sm:$0xff]
    %v344 = vld [vmem:[#allocation2 + $0x10] sm:$0xff]
    %v345 = vld [vmem:[#allocation2 + $0x18] sm:$0xff]
    %v346 = vld [vmem:[#allocation2 + $0x20] sm:$0xff]
    %v347 = vld [vmem:[#allocation2 + $0x28] sm:$0xff]
    %s348 = scalar_lea.vmem [#allocation9], 5
    %v349 = vld [vmem:[%s348] ss:$8 sm:$0xf]
    %v351 = vperm.slane %v349, 0
    %v352 = vperm.slane %v349, 1
    %v353 = vperm.slane %v349, 2
    %v354 = vperm.slane %v349, 3
    %355 = vrot.lane.b32.xlu0 %v351, 1
    %v356 = vpop.permute.xlu0 %355
    %357 = vrot.lane.b32.xlu0 %v352, 1
    %v358 = vpop.permute.xlu0 %357
    %359 = vrot.lane.b32.xlu0 %v353, 1
    %v360 = vpop.permute.xlu0 %359
    %361 = vrot.lane.b32.xlu0 %v354, 1
    %v362 = vpop.permute.xlu0 %361
    %v363 = vsel %vm307, %v356, %v358
    %v364 = vsel %vm307, %v358, %v360
    %v365 = vsel %vm307, %v360, %v362
    %v371 = vmul.f32 %v343, %v356
    %v372 = vmul.f32 %v344, %v363
    %v373 = vmul.f32 %v345, %v364
    %v374 = vmul.f32 %v346, %v365
    %v375 = vmul.f32 %v347, %v362
    %381 = vrot.lane.b32.xlu0 %v371, 127
    %v382 = vpop.permute.xlu0 %381
    %383 = vrot.lane.b32.xlu0 %v372, 127
    %v384 = vpop.permute.xlu0 %383
    %385 = vrot.lane.b32.xlu0 %v373, 127
    %v386 = vpop.permute.xlu0 %385
    %387 = vrot.lane.b32.xlu0 %v374, 127
    %v388 = vpop.permute.xlu0 %387
    %389 = vrot.lane.b32.xlu0 %v375, 127
    %v390 = vpop.permute.xlu0 %389
    %v391 = vsel %vm278, %v382, %v384
    %v392 = vsel %vm278, %v384, %v386
    %v393 = vsel %vm278, %v386, %v388
    %v394 = vsel %vm278, %v388, %v390
    %399 = vst [vmem:[#allocation3 + $0xa0] sm:$0xff] %v391
    %400 = vst [vmem:[#allocation3 + $0xa8] sm:$0xff] %v392
    %401 = vst [vmem:[#allocation3 + $0xb0] sm:$0xff] %v393
    %402 = vst [vmem:[#allocation3 + $0xb8] sm:$0xff] %v394
    %v403 = vld [vmem:[#allocation2 + $0x8] sm:$0xff]
    %v404 = vld [vmem:[#allocation2 + $0x10] sm:$0xff]
    %v405 = vld [vmem:[#allocation2 + $0x18] sm:$0xff]
    %v406 = vld [vmem:[#allocation2 + $0x20] sm:$0xff]
    %v407 = vld [vmem:[#allocation2 + $0x28] sm:$0xff]
    %s408 = scalar_lea.vmem [#allocation9], 6
    %v409 = vld [vmem:[%s408] ss:$8 sm:$0xf]
    %v411 = vperm.slane %v409, 0
    %v412 = vperm.slane %v409, 1
    %v413 = vperm.slane %v409, 2
    %v414 = vperm.slane %v409, 3
    %415 = vrot.lane.b32.xlu0 %v411, 15
    %v416 = vpop.permute.xlu0 %415
    %417 = vrot.lane.b32.xlu0 %v412, 15
    %v418 = vpop.permute.xlu0 %417
    %419 = vrot.lane.b32.xlu0 %v413, 15
    %v420 = vpop.permute.xlu0 %419
    %421 = vrot.lane.b32.xlu0 %v414, 15
    %v422 = vpop.permute.xlu0 %421
    %v423 = vsel %vm245, %v416, %v418
    %v424 = vsel %vm245, %v418, %v420
    %v425 = vsel %vm245, %v420, %v422
    %v431 = vmul.f32 %v403, %v416
    %v432 = vmul.f32 %v404, %v423
    %v433 = vmul.f32 %v405, %v424
    %v434 = vmul.f32 %v406, %v425
    %v435 = vmul.f32 %v407, %v422
    %441 = vrot.lane.b32.xlu0 %v431, 113
    %v442 = vpop.permute.xlu0 %441
    %443 = vrot.lane.b32.xlu0 %v432, 113
    %v444 = vpop.permute.xlu0 %443
    %445 = vrot.lane.b32.xlu0 %v433, 113
    %v446 = vpop.permute.xlu0 %445
    %447 = vrot.lane.b32.xlu0 %v434, 113
    %v448 = vpop.permute.xlu0 %447
    %449 = vrot.lane.b32.xlu0 %v435, 113
    %v450 = vpop.permute.xlu0 %449
    %v451 = vsel %vm216, %v442, %v444
    %v452 = vsel %vm216, %v444, %v446
    %v453 = vsel %vm216, %v446, %v448
    %v454 = vsel %vm216, %v448, %v450
    %459 = vst [vmem:[#allocation3 + $0xc0] sm:$0xff] %v451
    %460 = vst [vmem:[#allocation3 + $0xc8] sm:$0xff] %v452
    %461 = vst [vmem:[#allocation3 + $0xd0] sm:$0xff] %v453
    %462 = vst [vmem:[#allocation3 + $0xd8] sm:$0xff] %v454
    %v463 = vld [vmem:[#allocation2 + $0x8] sm:$0xff]
    %v464 = vld [vmem:[#allocation2 + $0x10] sm:$0xff]
    %v465 = vld [vmem:[#allocation2 + $0x18] sm:$0xff]
    %v466 = vld [vmem:[#allocation2 + $0x20] sm:$0xff]
    %v467 = vld [vmem:[#allocation2 + $0x28] sm:$0xff]
    %s468 = scalar_lea.vmem [#allocation9], 7
    %v469 = vld [vmem:[%s468] ss:$8 sm:$0xf]
    %v471 = vperm.slane %v469, 0
    %v472 = vperm.slane %v469, 1
    %v473 = vperm.slane %v469, 2
    %v474 = vperm.slane %v469, 3
    %475 = vrot.lane.b32.xlu0 %v471, 16
    %v476 = vpop.permute.xlu0 %475
    %477 = vrot.lane.b32.xlu0 %v472, 16
    %v478 = vpop.permute.xlu0 %477
    %479 = vrot.lane.b32.xlu0 %v473, 16
    %v480 = vpop.permute.xlu0 %479
    %481 = vrot.lane.b32.xlu0 %v474, 16
    %v482 = vpop.permute.xlu0 %481
    %v483 = vsel %vm183, %v476, %v478
    %v484 = vsel %vm183, %v478, %v480
    %v485 = vsel %vm183, %v480, %v482
    %v491 = vmul.f32 %v463, %v476
    %v492 = vmul.f32 %v464, %v483
    %v493 = vmul.f32 %v465, %v484
    %v494 = vmul.f32 %v466, %v485
    %v495 = vmul.f32 %v467, %v482
    %501 = vrot.lane.b32.xlu0 %v491, 112
    %v502 = vpop.permute.xlu0 %501
    %503 = vrot.lane.b32.xlu0 %v492, 112
    %v504 = vpop.permute.xlu0 %503
    %505 = vrot.lane.b32.xlu0 %v493, 112
    %v506 = vpop.permute.xlu0 %505
    %507 = vrot.lane.b32.xlu0 %v494, 112
    %v508 = vpop.permute.xlu0 %507
    %509 = vrot.lane.b32.xlu0 %v495, 112
    %v510 = vpop.permute.xlu0 %509
    %v511 = vsel %vm154, %v502, %v504
    %v512 = vsel %vm154, %v504, %v506
    %v513 = vsel %vm154, %v506, %v508
    %v514 = vsel %vm154, %v508, %v510
    %519 = vst [vmem:[#allocation3 + $0xe0] sm:$0xff] %v511
    %520 = vst [vmem:[#allocation3 + $0xe8] sm:$0xff] %v512
    %521 = vst [vmem:[#allocation3 + $0xf0] sm:$0xff] %v513
    %522 = vst [vmem:[#allocation3 + $0xf8] sm:$0xff] %v514
    %v523 = vld [vmem:[#allocation2 + $0x8] sm:$0xff]
    %v524 = vld [vmem:[#allocation2 + $0x10] sm:$0xff]
    %v525 = vld [vmem:[#allocation2 + $0x18] sm:$0xff]
    %v526 = vld [vmem:[#allocation2 + $0x20] sm:$0xff]
    %v527 = vld [vmem:[#allocation2 + $0x28] sm:$0xff]
    %s528 = scalar_lea.vmem [#allocation9], 32
    %v529 = vld [vmem:[%s528] ss:$8 sm:$0xf]
    %v531 = vperm.slane %v529, 0
    %v532 = vperm.slane %v529, 1
    %v533 = vperm.slane %v529, 2
    %v534 = vperm.slane %v529, 3
    %535 = vrot.lane.b32.xlu0 %v531, 17
    %v536 = vpop.permute.xlu0 %535
    %537 = vrot.lane.b32.xlu0 %v532, 17
    %v538 = vpop.permute.xlu0 %537
    %539 = vrot.lane.b32.xlu0 %v533, 17
    %v540 = vpop.permute.xlu0 %539
    %541 = vrot.lane.b32.xlu0 %v534, 17
    %v542 = vpop.permute.xlu0 %541
    %v543 = vsel %vm121, %v536, %v538
    %v544 = vsel %vm121, %v538, %v540
    %v545 = vsel %vm121, %v540, %v542
    %v551 = vmul.f32 %v523, %v536
    %v552 = vmul.f32 %v524, %v543
    %v553 = vmul.f32 %v525, %v544
    %v554 = vmul.f32 %v526, %v545
    %v555 = vmul.f32 %v527, %v542
    %561 = vrot.lane.b32.xlu0 %v551, 111
    %v562 = vpop.permute.xlu0 %561
    %563 = vrot.lane.b32.xlu0 %v552, 111
    %v564 = vpop.permute.xlu0 %563
    %565 = vrot.lane.b32.xlu0 %v553, 111
    %v566 = vpop.permute.xlu0 %565
    %567 = vrot.lane.b32.xlu0 %v554, 111
    %v568 = vpop.permute.xlu0 %567
    %569 = vrot.lane.b32.xlu0 %v555, 111
    %v570 = vpop.permute.xlu0 %569
    %v571 = vsel %vm92, %v562, %v564
    %v572 = vsel %vm92, %v564, %v566
    %v573 = vsel %vm92, %v566, %v568
    %v574 = vsel %vm92, %v568, %v570
    %579 = vst [vmem:[#allocation3 + $0x100] sm:$0xff] %v571
    %580 = vst [vmem:[#allocation3 + $0x108] sm:$0xff] %v572
    %581 = vst [vmem:[#allocation3 + $0x110] sm:$0xff] %v573
    %582 = vst [vmem:[#allocation3 + $0x118] sm:$0xff] %v574
    %v583 = vld [vmem:[%s2] sm:$0xff]
    %v584 = vld [vmem:[#allocation3] sm:$0xff]
    %v585 = vld [vmem:[#allocation3 + $0x8] sm:$0xff]
    %v586 = vld [vmem:[#allocation3 + $0x10] sm:$0xff]
    %v587 = vld [vmem:[#allocation3 + $0x18] sm:$0xff]
    %v588 = vld [vmem:[#allocation3 + $0x20] sm:$0xff]
    %v589 = vld [vmem:[#allocation3 + $0x28] sm:$0xff]
    %v590 = vld [vmem:[#allocation3 + $0x30] sm:$0xff]
    %v591 = vld [vmem:[#allocation3 + $0x38] sm:$0xff]
    %v592 = vld [vmem:[#allocation3 + $0x40] sm:$0xff]
    %v593 = vld [vmem:[#allocation3 + $0x48] sm:$0xff]
    %v594 = vld [vmem:[#allocation3 + $0x50] sm:$0xff]
    %v595 = vld [vmem:[#allocation3 + $0x58] sm:$0xff]
    %v596 = vld [vmem:[#allocation3 + $0x60] sm:$0xff]
    %v597 = vld [vmem:[#allocation3 + $0x68] sm:$0xff]
    %v598 = vld [vmem:[#allocation3 + $0x70] sm:$0xff]
    %v599 = vld [vmem:[#allocation3 + $0x78] sm:$0xff]
    %v600 = vld [vmem:[#allocation3 + $0x80] sm:$0xff]
    %v601 = vld [vmem:[#allocation3 + $0x88] sm:$0xff]
    %v602 = vld [vmem:[#allocation3 + $0x90] sm:$0xff]
    %v603 = vld [vmem:[#allocation3 + $0x98] sm:$0xff]
    %v604 = vld [vmem:[#allocation3 + $0xa0] sm:$0xff]
    %v605 = vld [vmem:[#allocation3 + $0xa8] sm:$0xff]
    %v606 = vld [vmem:[#allocation3 + $0xb0] sm:$0xff]
    %v607 = vld [vmem:[#allocation3 + $0xb8] sm:$0xff]
    %v608 = vld [vmem:[#allocation3 + $0xc0] sm:$0xff]
    %v609 = vld [vmem:[#allocation3 + $0xc8] sm:$0xff]
    %v610 = vld [vmem:[#allocation3 + $0xd0] sm:$0xff]
    %v611 = vld [vmem:[#allocation3 + $0xd8] sm:$0xff]
    %v612 = vld [vmem:[#allocation3 + $0xe0] sm:$0xff]
    %v613 = vld [vmem:[#allocation3 + $0xe8] sm:$0xff]
    %v614 = vld [vmem:[#allocation3 + $0xf0] sm:$0xff]
    %v615 = vld [vmem:[#allocation3 + $0xf8] sm:$0xff]
    %v616 = vld [vmem:[#allocation3 + $0x100] sm:$0xff]
    %v617 = vld [vmem:[#allocation3 + $0x108] sm:$0xff]
    %v618 = vld [vmem:[#allocation3 + $0x110] sm:$0xff]
    %v619 = vld [vmem:[#allocation3 + $0x118] sm:$0xff]
    %v620 = vld [vmem:[%s3] sm:$0xff]
    %622 = vset.pattern.permute.xlu0 0
    %623 = vperm.xlu0 %622, %v620
    %v624 = vpop.permute.xlu0 %623
    %vm626 = vcmask 588800
    %v628 = vsel %vm626, %v583, 0
    %630 = vmatpush.msra.mxu0 0.0
    %631 = vmatpush.msra.mxu0 0.0
    %632 = vmatpush.msra.mxu0 0.0
    %633 = vmatpush.msra.mxu0 0.0
    %634 = vmatpush.msra.mxu0 0.0
    %635 = vmatpush.msra.mxu0 0.0
    %636 = vmatpush.msra.mxu0 0.0
    %637 = vmatpush.msra.mxu0 %v616
    %638 = vmatpush.msra.mxu0 %v612
    %639 = vmatpush.msra.mxu0 %v608
    %640 = vmatpush.msra.mxu0 %v604
    %641 = vmatpush.msra.mxu0 %v600
    %642 = vmatpush.msra.mxu0 %v596
    %643 = vmatpush.msra.mxu0 %v592
    %644 = vmatpush.msra.mxu0 %v588
    %645 = vmatpush.msra.mxu0 %v584
    %646 = vmatmul.f32.gmra.mxu0 %v628
    %v647 = vpop.f32.mrf.mxu0
    %v648 = vadd.f32 %v624, %v647
    %649 = vdwg.mxu0
    %650 = vmatpush.msra.mxu0 0.0
    %651 = vmatpush.msra.mxu0 0.0
    %652 = vmatpush.msra.mxu0 0.0
    %653 = vmatpush.msra.mxu0 0.0
    %654 = vmatpush.msra.mxu0 0.0
    %655 = vmatpush.msra.mxu0 0.0
    %656 = vmatpush.msra.mxu0 0.0
    %657 = vmatpush.msra.mxu0 %v617
    %658 = vmatpush.msra.mxu0 %v613
    %659 = vmatpush.msra.mxu0 %v609
    %660 = vmatpush.msra.mxu0 %v605
    %661 = vmatpush.msra.mxu0 %v601
    %662 = vmatpush.msra.mxu0 %v597
    %663 = vmatpush.msra.mxu0 %v593
    %664 = vmatpush.msra.mxu0 %v589
    %665 = vmatpush.msra.mxu0 %v585
    %666 = vmatmul.f32.gmra.mxu0 %v628
    %v667 = vpop.f32.mrf.mxu0
    %v668 = vadd.f32 %v624, %v667
    %669 = vdwg.mxu0
    %670 = vmatpush.msra.mxu0 0.0
    %671 = vmatpush.msra.mxu0 0.0
    %672 = vmatpush.msra.mxu0 0.0
    %673 = vmatpush.msra.mxu0 0.0
    %674 = vmatpush.msra.mxu0 0.0
    %675 = vmatpush.msra.mxu0 0.0
    %676 = vmatpush.msra.mxu0 0.0
    %677 = vmatpush.msra.mxu0 %v618
    %678 = vmatpush.msra.mxu0 %v614
    %679 = vmatpush.msra.mxu0 %v610
    %680 = vmatpush.msra.mxu0 %v606
    %681 = vmatpush.msra.mxu0 %v602
    %682 = vmatpush.msra.mxu0 %v598
    %683 = vmatpush.msra.mxu0 %v594
    %684 = vmatpush.msra.mxu0 %v590
    %685 = vmatpush.msra.mxu0 %v586
    %686 = vmatmul.f32.gmra.mxu0 %v628
    %v687 = vpop.f32.mrf.mxu0
    %v688 = vadd.f32 %v624, %v687
    %689 = vdwg.mxu0
    %690 = vmatpush.msra.mxu0 0.0
    %691 = vmatpush.msra.mxu0 0.0
    %692 = vmatpush.msra.mxu0 0.0
    %693 = vmatpush.msra.mxu0 0.0
    %694 = vmatpush.msra.mxu0 0.0
    %695 = vmatpush.msra.mxu0 0.0
    %696 = vmatpush.msra.mxu0 0.0
    %697 = vmatpush.msra.mxu0 %v619
    %698 = vmatpush.msra.mxu0 %v615
    %699 = vmatpush.msra.mxu0 %v611
    %700 = vmatpush.msra.mxu0 %v607
    %701 = vmatpush.msra.mxu0 %v603
    %702 = vmatpush.msra.mxu0 %v599
    %703 = vmatpush.msra.mxu0 %v595
    %704 = vmatpush.msra.mxu0 %v591
    %705 = vmatpush.msra.mxu0 %v587
    %706 = vmatmul.f32.gmra.mxu0 %v628
    %v707 = vpop.f32.mrf.mxu0
    %v708 = vadd.f32 %v624, %v707
    %709 = vdwg.mxu0
    %v710 = vmax.f32 %v648, 0.0
    %v711 = vmax.f32 %v668, 0.0
    %v712 = vmax.f32 %v688, 0.0
    %v713 = vmax.f32 %v708, 0.0
    %714 = vst [vmem:[#allocation4 + $0x8] sm:$0xff] %v710
    %715 = vst [vmem:[#allocation4 + $0x10] sm:$0xff] %v711
    %716 = vst [vmem:[#allocation4 + $0x18] sm:$0xff] %v712
    %717 = vst [vmem:[#allocation4 + $0x20] sm:$0xff] %v713
    %v718 = vld [vmem:[#allocation4] sm:$0xff]
    %v719 = vld [vmem:[#allocation4 + $0x8] sm:$0xff]
    %v720 = vld [vmem:[#allocation4 + $0x10] sm:$0xff]
    %v721 = vld [vmem:[#allocation4 + $0x18] sm:$0xff]
    %v722 = vld [vmem:[#allocation4 + $0x20] sm:$0xff]
    %v723 = vld [vmem:[#allocation9] ss:$8 sm:$0xf]
    %v725 = vperm.slane %v723, 0
    %v726 = vperm.slane %v723, 1
    %v727 = vperm.slane %v723, 2
    %v728 = vperm.slane %v723, 3
    %729 = vrot.lane.b32.xlu0 %v725, 111
    %v730 = vpop.permute.xlu0 %729
    %731 = vrot.lane.b32.xlu0 %v726, 111
    %v732 = vpop.permute.xlu0 %731
    %733 = vrot.lane.b32.xlu0 %v727, 111
    %v734 = vpop.permute.xlu0 %733
    %735 = vrot.lane.b32.xlu0 %v728, 111
    %v736 = vpop.permute.xlu0 %735
    %v737 = vsel %vm92, %v730, %v732
    %v738 = vsel %vm92, %v732, %v734
    %v739 = vsel %vm92, %v734, %v736
    %v745 = vmul.f32 %v718, %v730
    %v746 = vmul.f32 %v719, %v737
    %v747 = vmul.f32 %v720, %v738
    %v748 = vmul.f32 %v721, %v739
    %v749 = vmul.f32 %v722, %v736
    %755 = vrot.lane.b32.xlu0 %v745, 17
    %v756 = vpop.permute.xlu0 %755
    %757 = vrot.lane.b32.xlu0 %v746, 17
    %v758 = vpop.permute.xlu0 %757
    %759 = vrot.lane.b32.xlu0 %v747, 17
    %v760 = vpop.permute.xlu0 %759
    %761 = vrot.lane.b32.xlu0 %v748, 17
    %v762 = vpop.permute.xlu0 %761
    %763 = vrot.lane.b32.xlu0 %v749, 17
    %v764 = vpop.permute.xlu0 %763
    %v765 = vsel %vm121, %v756, %v758
    %v766 = vsel %vm121, %v758, %v760
    %v767 = vsel %vm121, %v760, %v762
    %v768 = vsel %vm121, %v762, %v764
    %773 = vst [vmem:[#allocation5] sm:$0xff] %v765
    %774 = vst [vmem:[#allocation5 + $0x8] sm:$0xff] %v766
    %775 = vst [vmem:[#allocation5 + $0x10] sm:$0xff] %v767
    %776 = vst [vmem:[#allocation5 + $0x18] sm:$0xff] %v768
    %v777 = vld [vmem:[#allocation4] sm:$0xff]
    %v778 = vld [vmem:[#allocation4 + $0x8] sm:$0xff]
    %v779 = vld [vmem:[#allocation4 + $0x10] sm:$0xff]
    %v780 = vld [vmem:[#allocation4 + $0x18] sm:$0xff]
    %v781 = vld [vmem:[#allocation4 + $0x20] sm:$0xff]
    %v782 = vld [vmem:[%s139] ss:$8 sm:$0xf]
    %v784 = vperm.slane %v782, 0
    %v785 = vperm.slane %v782, 1
    %v786 = vperm.slane %v782, 2
    %v787 = vperm.slane %v782, 3
    %788 = vrot.lane.b32.xlu0 %v784, 112
    %v789 = vpop.permute.xlu0 %788
    %790 = vrot.lane.b32.xlu0 %v785, 112
    %v791 = vpop.permute.xlu0 %790
    %792 = vrot.lane.b32.xlu0 %v786, 112
    %v793 = vpop.permute.xlu0 %792
    %794 = vrot.lane.b32.xlu0 %v787, 112
    %v795 = vpop.permute.xlu0 %794
    %v796 = vsel %vm154, %v789, %v791
    %v797 = vsel %vm154, %v791, %v793
    %v798 = vsel %vm154, %v793, %v795
    %v804 = vmul.f32 %v777, %v789
    %v805 = vmul.f32 %v778, %v796
    %v806 = vmul.f32 %v779, %v797
    %v807 = vmul.f32 %v780, %v798
    %v808 = vmul.f32 %v781, %v795
    %814 = vrot.lane.b32.xlu0 %v804, 16
    %v815 = vpop.permute.xlu0 %814
    %816 = vrot.lane.b32.xlu0 %v805, 16
    %v817 = vpop.permute.xlu0 %816
    %818 = vrot.lane.b32.xlu0 %v806, 16
    %v819 = vpop.permute.xlu0 %818
    %820 = vrot.lane.b32.xlu0 %v807, 16
    %v821 = vpop.permute.xlu0 %820
    %822 = vrot.lane.b32.xlu0 %v808, 16
    %v823 = vpop.permute.xlu0 %822
    %v824 = vsel %vm183, %v815, %v817
    %v825 = vsel %vm183, %v817, %v819
    %v826 = vsel %vm183, %v819, %v821
    %v827 = vsel %vm183, %v821, %v823
    %832 = vst [vmem:[#allocation5 + $0x20] sm:$0xff] %v824
    %833 = vst [vmem:[#allocation5 + $0x28] sm:$0xff] %v825
    %834 = vst [vmem:[#allocation5 + $0x30] sm:$0xff] %v826
    %835 = vst [vmem:[#allocation5 + $0x38] sm:$0xff] %v827
    %v836 = vld [vmem:[#allocation4] sm:$0xff]
    %v837 = vld [vmem:[#allocation4 + $0x8] sm:$0xff]
    %v838 = vld [vmem:[#allocation4 + $0x10] sm:$0xff]
    %v839 = vld [vmem:[#allocation4 + $0x18] sm:$0xff]
    %v840 = vld [vmem:[#allocation4 + $0x20] sm:$0xff]
    %v841 = vld [vmem:[%s201] ss:$8 sm:$0xf]
    %v843 = vperm.slane %v841, 0
    %v844 = vperm.slane %v841, 1
    %v845 = vperm.slane %v841, 2
    %v846 = vperm.slane %v841, 3
    %847 = vrot.lane.b32.xlu0 %v843, 113
    %v848 = vpop.permute.xlu0 %847
    %849 = vrot.lane.b32.xlu0 %v844, 113
    %v850 = vpop.permute.xlu0 %849
    %851 = vrot.lane.b32.xlu0 %v845, 113
    %v852 = vpop.permute.xlu0 %851
    %853 = vrot.lane.b32.xlu0 %v846, 113
    %v854 = vpop.permute.xlu0 %853
    %v855 = vsel %vm216, %v848, %v850
    %v856 = vsel %vm216, %v850, %v852
    %v857 = vsel %vm216, %v852, %v854
    %v863 = vmul.f32 %v836, %v848
    %v864 = vmul.f32 %v837, %v855
    %v865 = vmul.f32 %v838, %v856
    %v866 = vmul.f32 %v839, %v857
    %v867 = vmul.f32 %v840, %v854
    %873 = vrot.lane.b32.xlu0 %v863, 15
    %v874 = vpop.permute.xlu0 %873
    %875 = vrot.lane.b32.xlu0 %v864, 15
    %v876 = vpop.permute.xlu0 %875
    %877 = vrot.lane.b32.xlu0 %v865, 15
    %v878 = vpop.permute.xlu0 %877
    %879 = vrot.lane.b32.xlu0 %v866, 15
    %v880 = vpop.permute.xlu0 %879
    %881 = vrot.lane.b32.xlu0 %v867, 15
    %v882 = vpop.permute.xlu0 %881
    %v883 = vsel %vm245, %v874, %v876
    %v884 = vsel %vm245, %v876, %v878
    %v885 = vsel %vm245, %v878, %v880
    %v886 = vsel %vm245, %v880, %v882
    %891 = vst [vmem:[#allocation5 + $0x40] sm:$0xff] %v883
    %892 = vst [vmem:[#allocation5 + $0x48] sm:$0xff] %v884
    %893 = vst [vmem:[#allocation5 + $0x50] sm:$0xff] %v885
    %894 = vst [vmem:[#allocation5 + $0x58] sm:$0xff] %v886
    %v895 = vld [vmem:[#allocation4] sm:$0xff]
    %v896 = vld [vmem:[#allocation4 + $0x8] sm:$0xff]
    %v897 = vld [vmem:[#allocation4 + $0x10] sm:$0xff]
    %v898 = vld [vmem:[#allocation4 + $0x18] sm:$0xff]
    %v899 = vld [vmem:[#allocation4 + $0x20] sm:$0xff]
    %v900 = vld [vmem:[%s263] ss:$8 sm:$0xf]
    %v902 = vperm.slane %v900, 0
    %v903 = vperm.slane %v900, 1
    %v904 = vperm.slane %v900, 2
    %v905 = vperm.slane %v900, 3
    %906 = vrot.lane.b32.xlu0 %v902, 127
    %v907 = vpop.permute.xlu0 %906
    %908 = vrot.lane.b32.xlu0 %v903, 127
    %v909 = vpop.permute.xlu0 %908
    %910 = vrot.lane.b32.xlu0 %v904, 127
    %v911 = vpop.permute.xlu0 %910
    %912 = vrot.lane.b32.xlu0 %v905, 127
    %v913 = vpop.permute.xlu0 %912
    %v914 = vsel %vm278, %v907, %v909
    %v915 = vsel %vm278, %v909, %v911
    %v916 = vsel %vm278, %v911, %v913
    %v922 = vmul.f32 %v895, %v907
    %v923 = vmul.f32 %v896, %v914
    %v924 = vmul.f32 %v897, %v915
    %v925 = vmul.f32 %v898, %v916
    %v926 = vmul.f32 %v899, %v913
    %932 = vrot.lane.b32.xlu0 %v922, 1
    %v933 = vpop.permute.xlu0 %932
    %934 = vrot.lane.b32.xlu0 %v923, 1
    %v935 = vpop.permute.xlu0 %934
    %936 = vrot.lane.b32.xlu0 %v924, 1
    %v937 = vpop.permute.xlu0 %936
    %938 = vrot.lane.b32.xlu0 %v925, 1
    %v939 = vpop.permute.xlu0 %938
    %940 = vrot.lane.b32.xlu0 %v926, 1
    %v941 = vpop.permute.xlu0 %940
    %v942 = vsel %vm307, %v933, %v935
    %v943 = vsel %vm307, %v935, %v937
    %v944 = vsel %vm307, %v937, %v939
    %v945 = vsel %vm307, %v939, %v941
    %950 = vst [vmem:[#allocation5 + $0x60] sm:$0xff] %v942
    %951 = vst [vmem:[#allocation5 + $0x68] sm:$0xff] %v943
    %952 = vst [vmem:[#allocation5 + $0x70] sm:$0xff] %v944
    %953 = vst [vmem:[#allocation5 + $0x78] sm:$0xff] %v945
    %v954 = vld [vmem:[#allocation4 + $0x8] sm:$0xff]
    %v955 = vld [vmem:[#allocation4 + $0x10] sm:$0xff]
    %v956 = vld [vmem:[#allocation4 + $0x18] sm:$0xff]
    %v957 = vld [vmem:[#allocation4 + $0x20] sm:$0xff]
    %v958 = vld [vmem:[%s324] ss:$8 sm:$0xf]
    %v960 = vperm.slane %v958, 0
    %v961 = vperm.slane %v958, 1
    %v962 = vperm.slane %v958, 2
    %v963 = vperm.slane %v958, 3
    %v968 = vmul.f32 %v954, %v960
    %v969 = vmul.f32 %v955, %v961
    %v970 = vmul.f32 %v956, %v962
    %v971 = vmul.f32 %v957, %v963
    %972 = vst [vmem:[#allocation5 + $0x80] sm:$0xff] %v968
    %973 = vst [vmem:[#allocation5 + $0x88] sm:$0xff] %v969
    %974 = vst [vmem:[#allocation5 + $0x90] sm:$0xff] %v970
    %975 = vst [vmem:[#allocation5 + $0x98] sm:$0xff] %v971
    %v976 = vld [vmem:[#allocation4 + $0x8] sm:$0xff]
    %v977 = vld [vmem:[#allocation4 + $0x10] sm:$0xff]
    %v978 = vld [vmem:[#allocation4 + $0x18] sm:$0xff]
    %v979 = vld [vmem:[#allocation4 + $0x20] sm:$0xff]
    %v980 = vld [vmem:[#allocation4 + $0x28] sm:$0xff]
    %v981 = vld [vmem:[%s348] ss:$8 sm:$0xf]
    %v983 = vperm.slane %v981, 0
    %v984 = vperm.slane %v981, 1
    %v985 = vperm.slane %v981, 2
    %v986 = vperm.slane %v981, 3
    %987 = vrot.lane.b32.xlu0 %v983, 1
    %v988 = vpop.permute.xlu0 %987
    %989 = vrot.lane.b32.xlu0 %v984, 1
    %v990 = vpop.permute.xlu0 %989
    %991 = vrot.lane.b32.xlu0 %v985, 1
    %v992 = vpop.permute.xlu0 %991
    %993 = vrot.lane.b32.xlu0 %v986, 1
    %v994 = vpop.permute.xlu0 %993
    %v995 = vsel %vm307, %v988, %v990
    %v996 = vsel %vm307, %v990, %v992
    %v997 = vsel %vm307, %v992, %v994
    %v1003 = vmul.f32 %v976, %v988
    %v1004 = vmul.f32 %v977, %v995
    %v1005 = vmul.f32 %v978, %v996
    %v1006 = vmul.f32 %v979, %v997
    %v1007 = vmul.f32 %v980, %v994
    %1013 = vrot.lane.b32.xlu0 %v1003, 127
    %v1014 = vpop.permute.xlu0 %1013
    %1015 = vrot.lane.b32.xlu0 %v1004, 127
    %v1016 = vpop.permute.xlu0 %1015
    %1017 = vrot.lane.b32.xlu0 %v1005, 127
    %v1018 = vpop.permute.xlu0 %1017
    %1019 = vrot.lane.b32.xlu0 %v1006, 127
    %v1020 = vpop.permute.xlu0 %1019
    %1021 = vrot.lane.b32.xlu0 %v1007, 127
    %v1022 = vpop.permute.xlu0 %1021
    %v1023 = vsel %vm278, %v1014, %v1016
    %v1024 = vsel %vm278, %v1016, %v1018
    %v1025 = vsel %vm278, %v1018, %v1020
    %v1026 = vsel %vm278, %v1020, %v1022
    %1031 = vst [vmem:[#allocation5 + $0xa0] sm:$0xff] %v1023
    %1032 = vst [vmem:[#allocation5 + $0xa8] sm:$0xff] %v1024
    %1033 = vst [vmem:[#allocation5 + $0xb0] sm:$0xff] %v1025
    %1034 = vst [vmem:[#allocation5 + $0xb8] sm:$0xff] %v1026
    %v1035 = vld [vmem:[#allocation4 + $0x8] sm:$0xff]
    %v1036 = vld [vmem:[#allocation4 + $0x10] sm:$0xff]
    %v1037 = vld [vmem:[#allocation4 + $0x18] sm:$0xff]
    %v1038 = vld [vmem:[#allocation4 + $0x20] sm:$0xff]
    %v1039 = vld [vmem:[#allocation4 + $0x28] sm:$0xff]
    %v1040 = vld [vmem:[%s408] ss:$8 sm:$0xf]
    %v1042 = vperm.slane %v1040, 0
    %v1043 = vperm.slane %v1040, 1
    %v1044 = vperm.slane %v1040, 2
    %v1045 = vperm.slane %v1040, 3
    %1046 = vrot.lane.b32.xlu0 %v1042, 15
    %v1047 = vpop.permute.xlu0 %1046
    %1048 = vrot.lane.b32.xlu0 %v1043, 15
    %v1049 = vpop.permute.xlu0 %1048
    %1050 = vrot.lane.b32.xlu0 %v1044, 15
    %v1051 = vpop.permute.xlu0 %1050
    %1052 = vrot.lane.b32.xlu0 %v1045, 15
    %v1053 = vpop.permute.xlu0 %1052
    %v1054 = vsel %vm245, %v1047, %v1049
    %v1055 = vsel %vm245, %v1049, %v1051
    %v1056 = vsel %vm245, %v1051, %v1053
    %v1062 = vmul.f32 %v1035, %v1047
    %v1063 = vmul.f32 %v1036, %v1054
    %v1064 = vmul.f32 %v1037, %v1055
    %v1065 = vmul.f32 %v1038, %v1056
    %v1066 = vmul.f32 %v1039, %v1053
    %1072 = vrot.lane.b32.xlu0 %v1062, 113
    %v1073 = vpop.permute.xlu0 %1072
    %1074 = vrot.lane.b32.xlu0 %v1063, 113
    %v1075 = vpop.permute.xlu0 %1074
    %1076 = vrot.lane.b32.xlu0 %v1064, 113
    %v1077 = vpop.permute.xlu0 %1076
    %1078 = vrot.lane.b32.xlu0 %v1065, 113
    %v1079 = vpop.permute.xlu0 %1078
    %1080 = vrot.lane.b32.xlu0 %v1066, 113
    %v1081 = vpop.permute.xlu0 %1080
    %v1082 = vsel %vm216, %v1073, %v1075
    %v1083 = vsel %vm216, %v1075, %v1077
    %v1084 = vsel %vm216, %v1077, %v1079
    %v1085 = vsel %vm216, %v1079, %v1081
    %1090 = vst [vmem:[#allocation5 + $0xc0] sm:$0xff] %v1082
    %1091 = vst [vmem:[#allocation5 + $0xc8] sm:$0xff] %v1083
    %1092 = vst [vmem:[#allocation5 + $0xd0] sm:$0xff] %v1084
    %1093 = vst [vmem:[#allocation5 + $0xd8] sm:$0xff] %v1085
    %v1094 = vld [vmem:[#allocation4 + $0x8] sm:$0xff]
    %v1095 = vld [vmem:[#allocation4 + $0x10] sm:$0xff]
    %v1096 = vld [vmem:[#allocation4 + $0x18] sm:$0xff]
    %v1097 = vld [vmem:[#allocation4 + $0x20] sm:$0xff]
    %v1098 = vld [vmem:[#allocation4 + $0x28] sm:$0xff]
    %v1099 = vld [vmem:[%s468] ss:$8 sm:$0xf]
    %v1101 = vperm.slane %v1099, 0
    %v1102 = vperm.slane %v1099, 1
    %v1103 = vperm.slane %v1099, 2
    %v1104 = vperm.slane %v1099, 3
    %1105 = vrot.lane.b32.xlu0 %v1101, 16
    %v1106 = vpop.permute.xlu0 %1105
    %1107 = vrot.lane.b32.xlu0 %v1102, 16
    %v1108 = vpop.permute.xlu0 %1107
    %1109 = vrot.lane.b32.xlu0 %v1103, 16
    %v1110 = vpop.permute.xlu0 %1109
    %1111 = vrot.lane.b32.xlu0 %v1104, 16
    %v1112 = vpop.permute.xlu0 %1111
    %v1113 = vsel %vm183, %v1106, %v1108
    %v1114 = vsel %vm183, %v1108, %v1110
    %v1115 = vsel %vm183, %v1110, %v1112
    %v1121 = vmul.f32 %v1094, %v1106
    %v1122 = vmul.f32 %v1095, %v1113
    %v1123 = vmul.f32 %v1096, %v1114
    %v1124 = vmul.f32 %v1097, %v1115
    %v1125 = vmul.f32 %v1098, %v1112
    %1131 = vrot.lane.b32.xlu0 %v1121, 112
    %v1132 = vpop.permute.xlu0 %1131
    %1133 = vrot.lane.b32.xlu0 %v1122, 112
    %v1134 = vpop.permute.xlu0 %1133
    %1135 = vrot.lane.b32.xlu0 %v1123, 112
    %v1136 = vpop.permute.xlu0 %1135
    %1137 = vrot.lane.b32.xlu0 %v1124, 112
    %v1138 = vpop.permute.xlu0 %1137
    %1139 = vrot.lane.b32.xlu0 %v1125, 112
    %v1140 = vpop.permute.xlu0 %1139
    %v1141 = vsel %vm154, %v1132, %v1134
    %v1142 = vsel %vm154, %v1134, %v1136
    %v1143 = vsel %vm154, %v1136, %v1138
    %v1144 = vsel %vm154, %v1138, %v1140
    %1149 = vst [vmem:[#allocation5 + $0xe0] sm:$0xff] %v1141
    %1150 = vst [vmem:[#allocation5 + $0xe8] sm:$0xff] %v1142
    %1151 = vst [vmem:[#allocation5 + $0xf0] sm:$0xff] %v1143
    %1152 = vst [vmem:[#allocation5 + $0xf8] sm:$0xff] %v1144
    %v1153 = vld [vmem:[#allocation4 + $0x8] sm:$0xff]
    %v1154 = vld [vmem:[#allocation4 + $0x10] sm:$0xff]
    %v1155 = vld [vmem:[#allocation4 + $0x18] sm:$0xff]
    %v1156 = vld [vmem:[#allocation4 + $0x20] sm:$0xff]
    %v1157 = vld [vmem:[#allocation4 + $0x28] sm:$0xff]
    %v1158 = vld [vmem:[%s528] ss:$8 sm:$0xf]
    %v1160 = vperm.slane %v1158, 0
    %v1161 = vperm.slane %v1158, 1
    %v1162 = vperm.slane %v1158, 2
    %v1163 = vperm.slane %v1158, 3
    %1164 = vrot.lane.b32.xlu0 %v1160, 17
    %v1165 = vpop.permute.xlu0 %1164
    %1166 = vrot.lane.b32.xlu0 %v1161, 17
    %v1167 = vpop.permute.xlu0 %1166
    %1168 = vrot.lane.b32.xlu0 %v1162, 17
    %v1169 = vpop.permute.xlu0 %1168
    %1170 = vrot.lane.b32.xlu0 %v1163, 17
    %v1171 = vpop.permute.xlu0 %1170
    %v1172 = vsel %vm121, %v1165, %v1167
    %v1173 = vsel %vm121, %v1167, %v1169
    %v1174 = vsel %vm121, %v1169, %v1171
    %v1180 = vmul.f32 %v1153, %v1165
    %v1181 = vmul.f32 %v1154, %v1172
    %v1182 = vmul.f32 %v1155, %v1173
    %v1183 = vmul.f32 %v1156, %v1174
    %v1184 = vmul.f32 %v1157, %v1171
    %1190 = vrot.lane.b32.xlu0 %v1180, 111
    %v1191 = vpop.permute.xlu0 %1190
    %1192 = vrot.lane.b32.xlu0 %v1181, 111
    %v1193 = vpop.permute.xlu0 %1192
    %1194 = vrot.lane.b32.xlu0 %v1182, 111
    %v1195 = vpop.permute.xlu0 %1194
    %1196 = vrot.lane.b32.xlu0 %v1183, 111
    %v1197 = vpop.permute.xlu0 %1196
    %1198 = vrot.lane.b32.xlu0 %v1184, 111
    %v1199 = vpop.permute.xlu0 %1198
    %v1200 = vsel %vm92, %v1191, %v1193
    %v1201 = vsel %vm92, %v1193, %v1195
    %v1202 = vsel %vm92, %v1195, %v1197
    %v1203 = vsel %vm92, %v1197, %v1199
    %1208 = vst [vmem:[#allocation5 + $0x100] sm:$0xff] %v1200
    %1209 = vst [vmem:[#allocation5 + $0x108] sm:$0xff] %v1201
    %1210 = vst [vmem:[#allocation5 + $0x110] sm:$0xff] %v1202
    %1211 = vst [vmem:[#allocation5 + $0x118] sm:$0xff] %v1203
    %v1212 = vld [vmem:[%s4] sm:$0xff]
    %v1213 = vld [vmem:[#allocation5] sm:$0xff]
    %v1214 = vld [vmem:[#allocation5 + $0x8] sm:$0xff]
    %v1215 = vld [vmem:[#allocation5 + $0x10] sm:$0xff]
    %v1216 = vld [vmem:[#allocation5 + $0x18] sm:$0xff]
    %v1217 = vld [vmem:[#allocation5 + $0x20] sm:$0xff]
    %v1218 = vld [vmem:[#allocation5 + $0x28] sm:$0xff]
    %v1219 = vld [vmem:[#allocation5 + $0x30] sm:$0xff]
    %v1220 = vld [vmem:[#allocation5 + $0x38] sm:$0xff]
    %v1221 = vld [vmem:[#allocation5 + $0x40] sm:$0xff]
    %v1222 = vld [vmem:[#allocation5 + $0x48] sm:$0xff]
    %v1223 = vld [vmem:[#allocation5 + $0x50] sm:$0xff]
    %v1224 = vld [vmem:[#allocation5 + $0x58] sm:$0xff]
    %v1225 = vld [vmem:[#allocation5 + $0x60] sm:$0xff]
    %v1226 = vld [vmem:[#allocation5 + $0x68] sm:$0xff]
    %v1227 = vld [vmem:[#allocation5 + $0x70] sm:$0xff]
    %v1228 = vld [vmem:[#allocation5 + $0x78] sm:$0xff]
    %v1229 = vld [vmem:[#allocation5 + $0x80] sm:$0xff]
    %v1230 = vld [vmem:[#allocation5 + $0x88] sm:$0xff]
    %v1231 = vld [vmem:[#allocation5 + $0x90] sm:$0xff]
    %v1232 = vld [vmem:[#allocation5 + $0x98] sm:$0xff]
    %v1233 = vld [vmem:[#allocation5 + $0xa0] sm:$0xff]
    %v1234 = vld [vmem:[#allocation5 + $0xa8] sm:$0xff]
    %v1235 = vld [vmem:[#allocation5 + $0xb0] sm:$0xff]
    %v1236 = vld [vmem:[#allocation5 + $0xb8] sm:$0xff]
    %v1237 = vld [vmem:[#allocation5 + $0xc0] sm:$0xff]
    %v1238 = vld [vmem:[#allocation5 + $0xc8] sm:$0xff]
    %v1239 = vld [vmem:[#allocation5 + $0xd0] sm:$0xff]
    %v1240 = vld [vmem:[#allocation5 + $0xd8] sm:$0xff]
    %v1241 = vld [vmem:[#allocation5 + $0xe0] sm:$0xff]
    %v1242 = vld [vmem:[#allocation5 + $0xe8] sm:$0xff]
    %v1243 = vld [vmem:[#allocation5 + $0xf0] sm:$0xff]
    %v1244 = vld [vmem:[#allocation5 + $0xf8] sm:$0xff]
    %v1245 = vld [vmem:[#allocation5 + $0x100] sm:$0xff]
    %v1246 = vld [vmem:[#allocation5 + $0x108] sm:$0xff]
    %v1247 = vld [vmem:[#allocation5 + $0x110] sm:$0xff]
    %v1248 = vld [vmem:[#allocation5 + $0x118] sm:$0xff]
    %v1249 = vld [vmem:[%s5] sm:$0xff]
    %1251 = vset.pattern.permute.xlu0 0
    %1252 = vperm.xlu0 %1251, %v1249
    %v1253 = vpop.permute.xlu0 %1252
    %v1256 = vsel %vm626, %v1212, 0
    %1258 = vmatpush.msra.mxu0 0.0
    %1259 = vmatpush.msra.mxu0 0.0
    %1260 = vmatpush.msra.mxu0 0.0
    %1261 = vmatpush.msra.mxu0 0.0
    %1262 = vmatpush.msra.mxu0 0.0
    %1263 = vmatpush.msra.mxu0 0.0
    %1264 = vmatpush.msra.mxu0 0.0
    %1265 = vmatpush.msra.mxu0 %v1245
    %1266 = vmatpush.msra.mxu0 %v1241
    %1267 = vmatpush.msra.mxu0 %v1237
    %1268 = vmatpush.msra.mxu0 %v1233
    %1269 = vmatpush.msra.mxu0 %v1229
    %1270 = vmatpush.msra.mxu0 %v1225
    %1271 = vmatpush.msra.mxu0 %v1221
    %1272 = vmatpush.msra.mxu0 %v1217
    %1273 = vmatpush.msra.mxu0 %v1213
    %1274 = vmatmul.f32.gmra.mxu0 %v1256
    %v1275 = vpop.f32.mrf.mxu0
    %v1276 = vadd.f32 %v1253, %v1275
    %1277 = vdwg.mxu0
    %1278 = vmatpush.msra.mxu0 0.0
    %1279 = vmatpush.msra.mxu0 0.0
    %1280 = vmatpush.msra.mxu0 0.0
    %1281 = vmatpush.msra.mxu0 0.0
    %1282 = vmatpush.msra.mxu0 0.0
    %1283 = vmatpush.msra.mxu0 0.0
    %1284 = vmatpush.msra.mxu0 0.0
    %1285 = vmatpush.msra.mxu0 %v1246
    %1286 = vmatpush.msra.mxu0 %v1242
    %1287 = vmatpush.msra.mxu0 %v1238
    %1288 = vmatpush.msra.mxu0 %v1234
    %1289 = vmatpush.msra.mxu0 %v1230
    %1290 = vmatpush.msra.mxu0 %v1226
    %1291 = vmatpush.msra.mxu0 %v1222
    %1292 = vmatpush.msra.mxu0 %v1218
    %1293 = vmatpush.msra.mxu0 %v1214
    %1294 = vmatmul.f32.gmra.mxu0 %v1256
    %v1295 = vpop.f32.mrf.mxu0
    %v1296 = vadd.f32 %v1253, %v1295
    %1297 = vdwg.mxu0
    %1298 = vmatpush.msra.mxu0 0.0
    %1299 = vmatpush.msra.mxu0 0.0
    %1300 = vmatpush.msra.mxu0 0.0
    %1301 = vmatpush.msra.mxu0 0.0
    %1302 = vmatpush.msra.mxu0 0.0
    %1303 = vmatpush.msra.mxu0 0.0
    %1304 = vmatpush.msra.mxu0 0.0
    %1305 = vmatpush.msra.mxu0 %v1247
    %1306 = vmatpush.msra.mxu0 %v1243
    %1307 = vmatpush.msra.mxu0 %v1239
    %1308 = vmatpush.msra.mxu0 %v1235
    %1309 = vmatpush.msra.mxu0 %v1231
    %1310 = vmatpush.msra.mxu0 %v1227
    %1311 = vmatpush.msra.mxu0 %v1223
    %1312 = vmatpush.msra.mxu0 %v1219
    %1313 = vmatpush.msra.mxu0 %v1215
    %1314 = vmatmul.f32.gmra.mxu0 %v1256
    %v1315 = vpop.f32.mrf.mxu0
    %v1316 = vadd.f32 %v1253, %v1315
    %1317 = vdwg.mxu0
    %1318 = vmatpush.msra.mxu0 0.0
    %1319 = vmatpush.msra.mxu0 0.0
    %1320 = vmatpush.msra.mxu0 0.0
    %1321 = vmatpush.msra.mxu0 0.0
    %1322 = vmatpush.msra.mxu0 0.0
    %1323 = vmatpush.msra.mxu0 0.0
    %1324 = vmatpush.msra.mxu0 0.0
    %1325 = vmatpush.msra.mxu0 %v1248
    %1326 = vmatpush.msra.mxu0 %v1244
    %1327 = vmatpush.msra.mxu0 %v1240
    %1328 = vmatpush.msra.mxu0 %v1236
    %1329 = vmatpush.msra.mxu0 %v1232
    %1330 = vmatpush.msra.mxu0 %v1228
    %1331 = vmatpush.msra.mxu0 %v1224
    %1332 = vmatpush.msra.mxu0 %v1220
    %1333 = vmatpush.msra.mxu0 %v1216
    %1334 = vmatmul.f32.gmra.mxu0 %v1256
    %v1335 = vpop.f32.mrf.mxu0
    %v1336 = vadd.f32 %v1253, %v1335
    %1337 = vdwg.mxu0
    %v1338 = vmax.f32 %v1276, 0.0
    %v1339 = vmax.f32 %v1296, 0.0
    %v1340 = vmax.f32 %v1316, 0.0
    %v1341 = vmax.f32 %v1336, 0.0
    %1342 = vst [vmem:[#allocation11] sm:$0xff] %v1338
    %1343 = vst [vmem:[#allocation11 + $0x8] sm:$0xff] %v1339
    %s1344 = scalar_lea.vmem [#allocation11], 16
    %1345 = vst [vmem:[%s1344] sm:$0xff] %v1340
    %1346 = vst [vmem:[%s1344 + $0x8] sm:$0xff] %v1341
    // Predicated region
    $region38: #{tpu_custom_call.1} parent=1 // pred_check
      _
    $region39: #{tpu_custom_call.1} parent=1 // pred_check_branch
      %1348 = sbr.rel (0) target = $region41
    $region40: #{tpu_custom_call.1} parent=1 // pred_region
      %1350 = vsyncadd [#allocation8], 0
      %s1351 = sshll.u32 [#allocation11], 4
      %s1352 = int_to_ptr.vmem [resolvable:$true] %s1351
      %s1353 = sshll.u32 %s6, 4
      %s1354 = int_to_ptr.hbm [resolvable:$true] %s1353
      %1359 = dma.vmem_to_hbm [thread:$0]  %s1352, 512, %s1354, [#allocation8], 256, 256, 16
    $region41: #{tpu_custom_call.1} parent=1 // pred_fallthru
      _
    // Predicated region
    $region42: #{tpu_custom_call.1} parent=1 // pred_check
      _
    $region43: #{tpu_custom_call.1} parent=1 // pred_check_branch
      %1361 = sbr.rel (0) target = $region45
    $region44: #{tpu_custom_call.1} parent=1 // pred_region
      %1363 = dma.done [#allocation8], 512
    $region45: #{tpu_custom_call.1} parent=1 // pred_fallthru
      _
    %1364 = vsyncpa [#allocation7], 1
    %1365 = vsyncpa [#allocation10], 1
    %1366 = vsyncpa [#allocation8], 1

</llo_original>
